<compile_context>
chip_gen: v5e
topology: v5e:2x2
jax: 0.10.0
libtpu: 0.0.40
codegen_flags: <defaults>
</compile_context>

<pallas_src>
import functools
import math

import jax
import jax.numpy as jnp
from jax.experimental import pallas as pl
from jax.experimental.pallas import tpu as pltpu


def _align8(v):
    return ((v + 7) // 8) * 8


# ----------------------------------------------------------------------------
# Parameters (PyTorch-default-style uniform init; weights stored [in, out])
# ----------------------------------------------------------------------------
def init_params(key, c, hidden, r_dim, z_dim):
    specs = [
        ("h_1", c + 1, hidden), ("h_2", hidden, hidden), ("h_3", hidden, r_dim),
        ("s_dense", r_dim, r_dim),
        ("s_to_z_mean", r_dim, z_dim), ("s_to_z_logvar", r_dim, z_dim),
        ("h_4", c + 1, hidden), ("h_5", hidden, hidden), ("h_6", hidden, r_dim),
        ("s", r_dim, z_dim),
        ("h_7", c, hidden), ("h_8", hidden, c),
        ("h_9", c, hidden), ("h_10", hidden, c),
        ("g_1", z_dim * 2 + c, hidden), ("g_2", hidden, hidden),
        ("g_3", hidden, hidden), ("g_4", hidden, hidden),
        ("g_mean", hidden, 1), ("g_var", hidden, 1),
        # 1x1 Conv1d layers (stored as [in, out] channel matmuls):
        ("q_conv", r_dim, r_dim // 8), ("k_conv", r_dim, r_dim // 8),
        ("v_conv", r_dim, r_dim),
    ]
    keys = jax.random.split(key, 2 * len(specs))
    p = {}
    for i, (name, fi, fo) in enumerate(specs):
        bound = 1.0 / math.sqrt(fi)
        p[name + "_w"] = jax.random.uniform(keys[2 * i], (fi, fo), jnp.float32, -bound, bound)
        p[name + "_b"] = jax.random.uniform(keys[2 * i + 1], (1, fo), jnp.float32, -bound, bound)
    p["gamma"] = jnp.zeros((1,), jnp.float32)   # PyTorch initialises gamma to zero.
    return p


# ----------------------------------------------------------------------------
# Pack every weight/bias into ONE kernel-ready VMEM slab (+ static layout dict)
# ----------------------------------------------------------------------------
def prepare_params(p, c, hidden, r_dim, z_dim):
    """Returns (slab [rows, lanes] f32, layout {name: (row0, din, dout, has_bias)}).

    All weight-level fusions are done here, host-side (zero in-kernel cost).
    """
    H, r, z = hidden, r_dim, z_dim
    f32 = jnp.float32
    dk = r // 8
    inv_scale = 1.0 / math.sqrt(1.0 * c)      # d_k == c in dot_product_attention

    def pad_rows(w, rows=8):
        return jnp.pad(w, ((0, rows - w.shape[0]), (0, 0)))

    def blockdiag(a, b):
        out = jnp.zeros((a.shape[0] + b.shape[0], a.shape[1] + b.shape[1]), f32)
        out = out.at[:a.shape[0], :a.shape[1]].set(a)
        out = out.at[a.shape[0]:, a.shape[1]:].set(b)
        return out

    entries = []

    # Merged twin encoders: cols [0:r] = latent (h_4..h_6), [r:2r] = determinate (h_1..h_3).
    entries.append(("enc1",
                    jnp.concatenate([pad_rows(p["h_4_w"]), pad_rows(p["h_1_w"])], axis=1),
                    jnp.concatenate([p["h_4_b"], p["h_1_b"]], axis=1)))
    entries.append(("enc2", blockdiag(p["h_5_w"], p["h_2_w"]),
                    jnp.concatenate([p["h_5_b"], p["h_2_b"]], axis=1)))
    entries.append(("enc3", blockdiag(p["h_6_w"], p["h_3_w"]),
                    jnp.concatenate([p["h_6_b"], p["h_3_b"]], axis=1)))

    # Fused self-attention 1x1 convs: cols [0:dk]=q, [koff:koff+dk]=k, [voff:voff+r]=v.
    koff = _align8(dk)
    voff = 2 * koff
    qkv_w = jnp.zeros((r, voff + r), f32)
    qkv_w = qkv_w.at[:, 0:dk].set(p["q_conv_w"])
    qkv_w = qkv_w.at[:, koff:koff + dk].set(p["k_conv_w"])
    qkv_w = qkv_w.at[:, voff:voff + r].set(p["v_conv_w"])
    qkv_b = jnp.zeros((1, voff + r), f32)
    qkv_b = qkv_b.at[:, 0:dk].set(p["q_conv_b"])
    qkv_b = qkv_b.at[:, koff:koff + dk].set(p["k_conv_b"])
    qkv_b = qkv_b.at[:, voff:voff + r].set(p["v_conv_b"])
    entries.append(("qkv", qkv_w, qkv_b))

    # Merged cross-attention x / x_target encoders; 1/sqrt(c) folded into h_10's half
    # (ReLU commutes with a positive scale, so this is exact).
    qoff = _align8(c)
    entries.append(("kq1",
                    jnp.concatenate([pad_rows(p["h_7_w"]), pad_rows(p["h_9_w"])], axis=1),
                    jnp.concatenate([p["h_7_b"], p["h_9_b"]], axis=1)))
    kq2_w = jnp.zeros((2 * H, qoff + c), f32)
    kq2_w = kq2_w.at[0:H, 0:c].set(p["h_8_w"])
    kq2_w = kq2_w.at[H:2 * H, qoff:qoff + c].set(p["h_10_w"] * inv_scale)
    kq2_b = jnp.zeros((1, qoff + c), f32)
    kq2_b = kq2_b.at[:, 0:c].set(p["h_8_b"])
    kq2_b = kq2_b.at[:, qoff:qoff + c].set(p["h_10_b"] * inv_scale)
    entries.append(("kq2", kq2_w, kq2_b))

    # Latent head.
    entries.append(("sdense", p["s_dense_w"], p["s_dense_b"]))
    entries.append(("zhead",
                    jnp.concatenate([p["s_to_z_mean_w"], p["s_to_z_logvar_w"]], axis=1),
                    jnp.concatenate([p["s_to_z_mean_b"], p["s_to_z_logvar_b"]], axis=1)))
    entries.append(("s", p["s_w"], p["s_b"]))

    # Decoder: g_1 split so cat([r, z, x]) @ Wg1 becomes a sum of three matmuls.
    entries.append(("g1r", p["g_1_w"][:z], None))
    entries.append(("g1z", p["g_1_w"][z:2 * z], None))
    entries.append(("g1x", pad_rows(p["g_1_w"][2 * z:]), p["g_1_b"]))
    entries.append(("g2", p["g_2_w"], p["g_2_b"]))
    entries.append(("g3", p["g_3_w"], p["g_3_b"]))
    entries.append(("g4", p["g_4_w"], p["g_4_b"]))
    entries.append(("ghead",
                    jnp.concatenate([p["g_mean_w"], p["g_var_w"]], axis=1),
                    jnp.concatenate([p["g_mean_b"], p["g_var_b"]], axis=1)))
    entries.append(("gamma", p["gamma"].reshape(1, 1), None))

    lanes = max(int(w.shape[1]) for _, w, _ in entries)
    layout, blocks, row = {}, [], 0
    for name, w, b in entries:
        din, dout = int(w.shape[0]), int(w.shape[1])
        n_rows = _align8(din + (1 if b is not None else 0))   # 8-aligned block starts
        blk = jnp.zeros((n_rows, lanes), f32)
        blk = blk.at[0:din, 0:dout].set(w)
        if b is not None:
            blk = blk.at[din:din + 1, 0:dout].set(b)
        blocks.append(blk)
        layout[name] = (row, din, dout, b is not None)
        row += n_rows
    slab = jnp.concatenate(blocks, axis=0)
    return slab, layout


# ----------------------------------------------------------------------------
# The single fused forward kernel (one grid step == one batch element)
# ----------------------------------------------------------------------------
def _np_kernel(xy_ref, eps_ref, slab_ref, pts_ref, zstats_ref, *,
               layout, N, c, r_dim, z_dim):
    f32 = jnp.float32
    r, z = r_dim, z_dim
    dk = r // 8
    koff = _align8(dk)
    voff = 2 * koff
    qoff = _align8(c)
    q_fold = N // r          # `.view`-quirk interleave factor (N == q_fold * r)

    xy = xy_ref[0]           # [N, 8] = (x | y | zero pad)
    eps = eps_ref[0]         # [1, z]

    def block(name):
        r0, din, dout, has_b = layout[name]
        w = slab_ref[r0:r0 + din, 0:dout]
        b = slab_ref[r0 + din:r0 + din + 1, 0:dout] if has_b else None
        return w, b

    def dense(x, name, relu=True):
        w, b = block(name)
        y = jnp.dot(x, w, preferred_element_type=f32)
        if b is not None:
            y = y + b
        return jnp.maximum(y, 0.0) if relu else y

    g_row = layout["gamma"][0]
    gamma = slab_ref[g_row:g_row + 1, 0:1]                       # [1, 1]

    # ---- merged twin 3-layer encoders -> [N, 2r] -----------------------------
    e = dense(dense(dense(xy, "enc1"), "enc2"), "enc3")
    enc_l = e[:, 0:r]                                            # encoder_latent (h_4..h_6)
    enc_d = e[:, r:2 * r]                                        # encoder_determinate (h_1..h_3)

    # Constant index grids for the `.view` quirk (built once, reused twice).
    row_i = jax.lax.broadcasted_iota(jnp.int32, (N, r), 0)
    col_i = jax.lax.broadcasted_iota(jnp.int32, (N, r), 1)

    def self_att_quirk(enc):
        """Self-attention (shared 1x1-conv q/k/v) including the PyTorch `.view` quirk.

        Returns rep_quirk [N, r]: the reference's `rep.view(B, N, C)` of the
        channel-first torch.bmm(v, attention^T) result.
        """
        qkv = dense(enc, "qkv", relu=False)                      # [N, voff + r]
        qh = qkv[:, 0:dk]
        kh = qkv[:, koff:koff + dk]
        vh = qkv[:, voff:voff + r]
        en = jnp.dot(qh, kh.T, preferred_element_type=f32)       # [N, N]
        en = en - jnp.max(en, axis=-1, keepdims=True)
        pe = jnp.exp(en)
        att = pe * pl.reciprocal(jnp.sum(pe, axis=-1, keepdims=True), approx=True)
        rep_cl = jnp.dot(att, vh, preferred_element_type=f32)    # [N, r]  channel-last
        r_cf = rep_cl.T                                          # [r, N] == torch bmm result
        if q_fold == 1:
            return r_cf     # square case: the flat .view() reinterpretation is the identity
        # Flat row-major reinterpretation [r, N] -> [N, r] expressed as a sum of
        # constant-selector matmuls (no in-kernel reshape needed):
        #   rep_quirk[a * q_fold + bb, :] = r_cf[a, bb*r:(bb+1)*r]
        out = None
        for bb in range(q_fold):
            sel = (row_i == col_i * q_fold + bb).astype(f32)     # [N, r] 0/1 selector
            term = jnp.dot(sel, r_cf[:, bb * r:(bb + 1) * r],
                           preferred_element_type=f32)
            out = term if out is None else out + term
        return out

    rep_l = self_att_quirk(enc_l)                                # [N, r]
    rep_d = self_att_quirk(enc_d)                                # [N, r]

    # ---- xy_to_z tail --------------------------------------------------------
    s_i = gamma * rep_l + enc_l                                  # gamma*rep + input residual
    s = jnp.mean(s_i, axis=0, keepdims=True)                     # [1, r]
    s = dense(s, "sdense")
    zh = dense(s, "zhead", relu=False)                           # [1, 2z] = (mean | logvar)
    mu = zh[:, 0:z]
    logvar = zh[:, z:2 * z]
    var = (0.1 + 0.9 / (1.0 + jnp.exp(-logvar))) * 0.1           # matches the reference
    zstats_ref[0, :, 0:z] = mu.astype(zstats_ref.dtype)
    zstats_ref[0, :, z:2 * z] = var.astype(zstats_ref.dtype)

    # ---- xy_to_r tail: 'dot' cross attention ---------------------------------
    r_i = gamma * rep_d + enc_d                                  # [N, r]
    kq = dense(dense(xy, "kq1"), "kq2")                          # [N, qoff + c]
    keys = kq[:, 0:c]                                            # crossAtt_x
    qrys = kq[:, qoff:qoff + c]                                  # crossAtt_xTarget (pre-scaled 1/sqrt(c))
    lg = jnp.dot(qrys, keys.T, preferred_element_type=f32)       # [N, N]
    lg = lg - jnp.max(lg, axis=-1, keepdims=True)
    pw = jnp.exp(lg)
    attw = pw * pl.reciprocal(jnp.sum(pw, axis=-1, keepdims=True), approx=True)
    rr = jnp.dot(attw, r_i, preferred_element_type=f32)          # [N, r]
    r_ctx = dense(rr, "s", relu=False)                           # self.s -> [N, z]
    pts_ref[0, :, 0:z] = r_ctx.astype(pts_ref.dtype)

    # ---- reparameterise (eval branch: z_all == z_context) + decoder ----------
    z_s = mu + var * eps                                         # Normal(mu, var).rsample()
    w_g1r, _ = block("g1r")
    w_g1z, _ = block("g1z")
    w_g1x, b_g1 = block("g1x")
    g = (jnp.dot(r_ctx, w_g1r, preferred_element_type=f32)       # cat([r, z, x]) @ Wg1
         + jnp.dot(z_s, w_g1z, preferred_element_type=f32)       #   == sum of split matmuls
         + jnp.dot(xy, w_g1x, preferred_element_type=f32)
         + b_g1)
    g = jnp.maximum(g, 0.0)
    g = dense(dense(dense(g, "g2"), "g3"), "g4")
    head = dense(g, "ghead", relu=False)                         # [N, 2] = (y_mean | y_var)
    sp = jnp.maximum(head, 0.0) + jnp.log(1.0 + jnp.exp(-jnp.abs(head)))
    sigma_all = 0.1 + 0.9 * sp                                   # sigma applied to column 1 only
    col = jax.lax.broadcasted_iota(jnp.int32, head.shape, 1)
    pts_ref[0, :, z:z + 2] = jnp.where(col == 0, head, sigma_all).astype(pts_ref.dtype)


# ----------------------------------------------------------------------------
# Wrapper (eval-mode semantics: z_all = z_context, r_sample = r_all = r_context)
# ----------------------------------------------------------------------------
def build_forward(layout, slab_shape, *, B, N, c, r_dim, z_dim):
    if N % r_dim != 0:
        # TODO(synk): general N vs r_dim `.view`-quirk reinterpretation not implemented.
        raise NotImplementedError("the .view-quirk path requires r_dim to divide N")
    ptw = z_dim + 2
    kernel = functools.partial(_np_kernel, layout=layout, N=N, c=c,
                               r_dim=r_dim, z_dim=z_dim)
    call = pl.pallas_call(
        kernel,
        out_shape=(jax.ShapeDtypeStruct((B, N, ptw), jnp.float32),       # r_ctx | y_mean | sigma
                   jax.ShapeDtypeStruct((B, 1, 2 * z_dim), jnp.float32)),  # mu | var
        grid=(B,),
        in_specs=[
            pl.BlockSpec((1, N, 8), lambda b: (b, 0, 0)),
            pl.BlockSpec((1, 1, z_dim), lambda b: (b, 0, 0)),
            pl.BlockSpec(tuple(slab_shape), lambda b: (0, 0)),   # constant index: fetched once
        ],
        out_specs=(
            pl.BlockSpec((1, N, ptw), lambda b: (b, 0, 0)),
            pl.BlockSpec((1, 1, 2 * z_dim), lambda b: (b, 0, 0)),
        ),
        compiler_params=pltpu.CompilerParams(dimension_semantics=("parallel",)),
    )

    def forward(slab, x_context, y_context, eps):
        # Padded (x | y); padded lanes are zero and matched by zero weight rows,
        # so results are identical to the unpadded math.
        xy = jnp.concatenate([x_context, y_context], axis=2)         # [B, N, c+1]
        xy_pad = jnp.pad(xy, ((0, 0), (0, 0), (0, 8 - (c + 1))))     # [B, N, 8]
        pts, zstats = call(xy_pad, eps, slab)
        r_context = pts[..., 0:z_dim]
        y_mean = pts[..., z_dim:z_dim + 1]
        sigma = pts[..., z_dim + 1:z_dim + 2]
        mu = zstats[:, 0, 0:z_dim]
        var = zstats[:, 0, z_dim:2 * z_dim]
        # Eval branch: z_all = z_context, r_sample = r_all = r_context.
        return (y_mean, sigma, mu, var, mu, var, r_context)

    return forward


# ----------------------------------------------------------------------------
if __name__ == "__main__":
    # Small, module-consistent shapes: data_dim == N (number of context points).
    B, N, c = 2, 64, 3
    hidden_dim, r_dim, z_dim = 32, 32, 16

    key = jax.random.PRNGKey(0)
    k_params, k_x, k_y, k_eps = jax.random.split(key, 4)
    params = init_params(k_params, c, hidden_dim, r_dim, z_dim)
    # PyTorch initialises gamma to zero (attention branch contributes nothing at init);
    # use a non-zero value here so the self-attention / quirk path is numerically exercised.
    params["gamma"] = jnp.full((1,), 0.5, jnp.float32)
    slab, layout = prepare_params(params, c, hidden_dim, r_dim, z_dim)

    x_context = jax.random.normal(k_x, (B, N, c), jnp.float32)
    y_context = jax.random.normal(k_y, (B, N, 1), jnp.float32)
    eps = jax.random.normal(k_eps, (B, 1, z_dim), jnp.float32)   # Normal(mu, var).rsample() noise

    fwd = jax.jit(build_forward(layout, slab.shape, B=B, N=N, c=c,
                                r_dim=r_dim, z_dim=z_dim))
    out = fwd(slab, x_context, y_context, eps)
    out = jax.tree_util.tree_map(jax.block_until_ready, out)

    y_mean, sigma, mu_all, var_all, mu_ctx, var_ctx, r_sample = out
    assert y_mean.shape == (B, N, 1) and sigma.shape == (B, N, 1)
    assert mu_all.shape == (B, z_dim) and var_all.shape == (B, z_dim)
    assert r_sample.shape == (B, N, z_dim)
    assert bool(jnp.all(jnp.isfinite(y_mean))) and bool(jnp.all(sigma >= 0.1))
    print("KERNEL_OK")
</pallas_src>

<mosaic_0001>
module attributes {stable_mosaic.version = 11 : i64} {
  func.func @_np_kernel(%arg0: i32, %arg1: memref<1x64x8xf32, #tpu.memory_space<vmem>>, %arg2: memref<1x1x16xf32, #tpu.memory_space<vmem>>, %arg3: memref<624x64xf32, #tpu.memory_space<vmem>>, %arg4: memref<1x64x18xf32, #tpu.memory_space<vmem>>, %arg5: memref<1x1x32xf32, #tpu.memory_space<vmem>>) attributes {dimension_semantics = [#tpu.dimension_semantics<parallel>], iteration_bounds = array<i64: 2>, scalar_prefetch = 0 : i64, scratch_operands = 0 : i64, tpu.core_type = #tpu.core_type<tc>, window_params = [{transform_indices = @transform_0, window_bounds = array<i64: 1, 64, 8>}, {transform_indices = @transform_1, window_bounds = array<i64: 1, 1, 16>}, {pipeline_mode = #tpu.pipeline_mode<synchronous>, transform_indices = @transform_2, window_bounds = array<i64: 624, 64>}, {transform_indices = @transform_3, window_bounds = array<i64: 1, 64, 18>}, {transform_indices = @transform_4, window_bounds = array<i64: 1, 1, 32>}]} {
    %c0 = arith.constant 0 : index
    %c0_0 = arith.constant 0 : index
    %c0_1 = arith.constant 0 : index
    %0 = vector.load %arg1[%c0, %c0_0, %c0_1] : memref<1x64x8xf32, #tpu.memory_space<vmem>>, vector<1x64x8xf32>
    %1 = vector.shape_cast %0 : vector<1x64x8xf32> to vector<64x8xf32>
    %c0_2 = arith.constant 0 : index
    %c0_3 = arith.constant 0 : index
    %c0_4 = arith.constant 0 : index
    %2 = vector.load %arg2[%c0_2, %c0_3, %c0_4] : memref<1x1x16xf32, #tpu.memory_space<vmem>>, vector<1x1x16xf32>
    %3 = vector.shape_cast %2 : vector<1x1x16xf32> to vector<1x16xf32>
    %c616 = arith.constant 616 : index
    %c0_5 = arith.constant 0 : index
    %4 = vector.load %arg3[%c616, %c0_5] : memref<624x64xf32, #tpu.memory_space<vmem>>, vector<1x1xf32>
    %c0_6 = arith.constant 0 : index
    %c0_7 = arith.constant 0 : index
    %5 = vector.load %arg3[%c0_6, %c0_7] : memref<624x64xf32, #tpu.memory_space<vmem>>, vector<8x64xf32>
    %c8 = arith.constant 8 : index
    %c0_8 = arith.constant 0 : index
    %6 = vector.load %arg3[%c8, %c0_8] : memref<624x64xf32, #tpu.memory_space<vmem>>, vector<1x64xf32>
    %cst = arith.constant dense<0.000000e+00> : vector<64x64xf32>
    %7 = tpu.matmul %1, %5, %cst {dimension_numbers = #tpu.dot_dimension_numbers<[1], [0], [0], [1], [0, 0, 1, 1], [], []>} : vector<64x8xf32>, vector<8x64xf32>, vector<64x64xf32> -> vector<64x64xf32>
    %8 = vector.broadcast %6 : vector<1x64xf32> to vector<64x64xf32>
    %9 = arith.addf %7, %8 : vector<64x64xf32>
    %cst_9 = arith.constant 0.000000e+00 : f32
    %10 = vector.broadcast %cst_9 : f32 to vector<64x64xf32>
    %11 = arith.maximumf %9, %10 : vector<64x64xf32>
    %c16 = arith.constant 16 : index
    %c0_10 = arith.constant 0 : index
    %12 = vector.load %arg3[%c16, %c0_10] : memref<624x64xf32, #tpu.memory_space<vmem>>, vector<64x64xf32>
    %c80 = arith.constant 80 : index
    %c0_11 = arith.constant 0 : index
    %13 = vector.load %arg3[%c80, %c0_11] : memref<624x64xf32, #tpu.memory_space<vmem>>, vector<1x64xf32>
    %cst_12 = arith.constant dense<0.000000e+00> : vector<64x64xf32>
    %14 = tpu.matmul %11, %12, %cst_12 {dimension_numbers = #tpu.dot_dimension_numbers<[1], [0], [0], [1], [0, 0, 1, 1], [], []>} : vector<64x64xf32>, vector<64x64xf32>, vector<64x64xf32> -> vector<64x64xf32>
    %15 = vector.broadcast %13 : vector<1x64xf32> to vector<64x64xf32>
    %16 = arith.addf %14, %15 : vector<64x64xf32>
    %cst_13 = arith.constant 0.000000e+00 : f32
    %17 = vector.broadcast %cst_13 : f32 to vector<64x64xf32>
    %18 = arith.maximumf %16, %17 : vector<64x64xf32>
    %c88 = arith.constant 88 : index
    %c0_14 = arith.constant 0 : index
    %19 = vector.load %arg3[%c88, %c0_14] : memref<624x64xf32, #tpu.memory_space<vmem>>, vector<64x64xf32>
    %c152 = arith.constant 152 : index
    %c0_15 = arith.constant 0 : index
    %20 = vector.load %arg3[%c152, %c0_15] : memref<624x64xf32, #tpu.memory_space<vmem>>, vector<1x64xf32>
    %cst_16 = arith.constant dense<0.000000e+00> : vector<64x64xf32>
    %21 = tpu.matmul %18, %19, %cst_16 {dimension_numbers = #tpu.dot_dimension_numbers<[1], [0], [0], [1], [0, 0, 1, 1], [], []>} : vector<64x64xf32>, vector<64x64xf32>, vector<64x64xf32> -> vector<64x64xf32>
    %22 = vector.broadcast %20 : vector<1x64xf32> to vector<64x64xf32>
    %23 = arith.addf %21, %22 : vector<64x64xf32>
    %cst_17 = arith.constant 0.000000e+00 : f32
    %24 = vector.broadcast %cst_17 : f32 to vector<64x64xf32>
    %25 = arith.maximumf %23, %24 : vector<64x64xf32>
    %26 = vector.extract_strided_slice %25 {offsets = [0, 0], sizes = [64, 32], strides = [1, 1]} : vector<64x64xf32> to vector<64x32xf32>
    %27 = vector.extract_strided_slice %25 {offsets = [0, 32], sizes = [64, 32], strides = [1, 1]} : vector<64x64xf32> to vector<64x32xf32>
    %28 = tpu.iota {dimensions = array<i32: 0>} : vector<64x32xi32>
    %29 = tpu.iota {dimensions = array<i32: 1>} : vector<64x32xi32>
    %c160 = arith.constant 160 : index
    %c0_18 = arith.constant 0 : index
    %30 = vector.load %arg3[%c160, %c0_18] : memref<624x64xf32, #tpu.memory_space<vmem>>, vector<32x48xf32>
    %c192 = arith.constant 192 : index
    %c0_19 = arith.constant 0 : index
    %31 = vector.load %arg3[%c192, %c0_19] : memref<624x64xf32, #tpu.memory_space<vmem>>, vector<1x48xf32>
    %cst_20 = arith.constant dense<0.000000e+00> : vector<64x48xf32>
    %32 = tpu.matmul %26, %30, %cst_20 {dimension_numbers = #tpu.dot_dimension_numbers<[1], [0], [0], [1], [0, 0, 1, 1], [], []>} : vector<64x32xf32>, vector<32x48xf32>, vector<64x48xf32> -> vector<64x48xf32>
    %33 = vector.broadcast %31 : vector<1x48xf32> to vector<64x48xf32>
    %34 = arith.addf %32, %33 : vector<64x48xf32>
    %35 = vector.extract_strided_slice %34 {offsets = [0, 0], sizes = [64, 4], strides = [1, 1]} : vector<64x48xf32> to vector<64x4xf32>
    %36 = vector.extract_strided_slice %34 {offsets = [0, 8], sizes = [64, 4], strides = [1, 1]} : vector<64x48xf32> to vector<64x4xf32>
    %37 = vector.extract_strided_slice %34 {offsets = [0, 16], sizes = [64, 32], strides = [1, 1]} : vector<64x48xf32> to vector<64x32xf32>
    %38 = tpu.transpose %36, [1, 0] : vector<64x4xf32> -> vector<4x64xf32>
    %cst_21 = arith.constant dense<0.000000e+00> : vector<64x64xf32>
    %39 = tpu.matmul %35, %38, %cst_21 {dimension_numbers = #tpu.dot_dimension_numbers<[1], [0], [0], [1], [0, 0, 1, 1], [], []>} : vector<64x4xf32>, vector<4x64xf32>, vector<64x64xf32> -> vector<64x64xf32>
    %cst_22 = arith.constant dense<0xFF800000> : vector<64xf32>
    %40 = vector.multi_reduction <maximumf>, %39, %cst_22 [1] : vector<64x64xf32> to vector<64xf32>
    %41 = vector.shape_cast %40 : vector<64xf32> to vector<64x1xf32>
    %42 = vector.broadcast %41 : vector<64x1xf32> to vector<64x64xf32>
    %43 = arith.subf %39, %42 : vector<64x64xf32>
    %44 = math.exp %43 : vector<64x64xf32>
    %cst_23 = arith.constant dense<0.000000e+00> : vector<64xf32>
    %45 = vector.multi_reduction <add>, %44, %cst_23 [1] : vector<64x64xf32> to vector<64xf32>
    %46 = vector.shape_cast %45 : vector<64xf32> to vector<64x1xf32>
    %47 = tpu.reciprocal %46 {approx = true} : vector<64x1xf32> -> vector<64x1xf32>
    %48 = vector.broadcast %47 : vector<64x1xf32> to vector<64x64xf32>
    %49 = arith.mulf %44, %48 : vector<64x64xf32>
    %cst_24 = arith.constant dense<0.000000e+00> : vector<64x32xf32>
    %50 = tpu.matmul %49, %37, %cst_24 {dimension_numbers = #tpu.dot_dimension_numbers<[1], [0], [0], [1], [0, 0, 1, 1], [], []>} : vector<64x64xf32>, vector<64x32xf32>, vector<64x32xf32> -> vector<64x32xf32>
    %51 = tpu.transpose %50, [1, 0] : vector<64x32xf32> -> vector<32x64xf32>
    %c2_i32 = arith.constant 2 : i32
    %52 = vector.broadcast %c2_i32 : i32 to vector<64x32xi32>
    %53 = arith.muli %29, %52 : vector<64x32xi32>
    %c0_i32 = arith.constant 0 : i32
    %54 = vector.broadcast %c0_i32 : i32 to vector<64x32xi32>
    %55 = arith.addi %53, %54 : vector<64x32xi32>
    %56 = arith.cmpi eq, %28, %55 : vector<64x32xi32>
    %57 = arith.extui %56 : vector<64x32xi1> to vector<64x32xi32>
    %58 = arith.sitofp %57 : vector<64x32xi32> to vector<64x32xf32>
    %59 = vector.extract_strided_slice %51 {offsets = [0, 0], sizes = [32, 32], strides = [1, 1]} : vector<32x64xf32> to vector<32x32xf32>
    %cst_25 = arith.constant dense<0.000000e+00> : vector<64x32xf32>
    %60 = tpu.matmul %58, %59, %cst_25 {dimension_numbers = #tpu.dot_dimension_numbers<[1], [0], [0], [1], [0, 0, 1, 1], [], []>} : vector<64x32xf32>, vector<32x32xf32>, vector<64x32xf32> -> vector<64x32xf32>
    %c2_i32_26 = arith.constant 2 : i32
    %61 = vector.broadcast %c2_i32_26 : i32 to vector<64x32xi32>
    %62 = arith.muli %29, %61 : vector<64x32xi32>
    %c1_i32 = arith.constant 1 : i32
    %63 = vector.broadcast %c1_i32 : i32 to vector<64x32xi32>
    %64 = arith.addi %62, %63 : vector<64x32xi32>
    %65 = arith.cmpi eq, %28, %64 : vector<64x32xi32>
    %66 = arith.extui %65 : vector<64x32xi1> to vector<64x32xi32>
    %67 = arith.sitofp %66 : vector<64x32xi32> to vector<64x32xf32>
    %68 = vector.extract_strided_slice %51 {offsets = [0, 32], sizes = [32, 32], strides = [1, 1]} : vector<32x64xf32> to vector<32x32xf32>
    %cst_27 = arith.constant dense<0.000000e+00> : vector<64x32xf32>
    %69 = tpu.matmul %67, %68, %cst_27 {dimension_numbers = #tpu.dot_dimension_numbers<[1], [0], [0], [1], [0, 0, 1, 1], [], []>} : vector<64x32xf32>, vector<32x32xf32>, vector<64x32xf32> -> vector<64x32xf32>
    %70 = arith.addf %60, %69 : vector<64x32xf32>
    %c160_28 = arith.constant 160 : index
    %c0_29 = arith.constant 0 : index
    %71 = vector.load %arg3[%c160_28, %c0_29] : memref<624x64xf32, #tpu.memory_space<vmem>>, vector<32x48xf32>
    %c192_30 = arith.constant 192 : index
    %c0_31 = arith.constant 0 : index
    %72 = vector.load %arg3[%c192_30, %c0_31] : memref<624x64xf32, #tpu.memory_space<vmem>>, vector<1x48xf32>
    %cst_32 = arith.constant dense<0.000000e+00> : vector<64x48xf32>
    %73 = tpu.matmul %27, %71, %cst_32 {dimension_numbers = #tpu.dot_dimension_numbers<[1], [0], [0], [1], [0, 0, 1, 1], [], []>} : vector<64x32xf32>, vector<32x48xf32>, vector<64x48xf32> -> vector<64x48xf32>
    %74 = vector.broadcast %72 : vector<1x48xf32> to vector<64x48xf32>
    %75 = arith.addf %73, %74 : vector<64x48xf32>
    %76 = vector.extract_strided_slice %75 {offsets = [0, 0], sizes = [64, 4], strides = [1, 1]} : vector<64x48xf32> to vector<64x4xf32>
    %77 = vector.extract_strided_slice %75 {offsets = [0, 8], sizes = [64, 4], strides = [1, 1]} : vector<64x48xf32> to vector<64x4xf32>
    %78 = vector.extract_strided_slice %75 {offsets = [0, 16], sizes = [64, 32], strides = [1, 1]} : vector<64x48xf32> to vector<64x32xf32>
    %79 = tpu.transpose %77, [1, 0] : vector<64x4xf32> -> vector<4x64xf32>
    %cst_33 = arith.constant dense<0.000000e+00> : vector<64x64xf32>
    %80 = tpu.matmul %76, %79, %cst_33 {dimension_numbers = #tpu.dot_dimension_numbers<[1], [0], [0], [1], [0, 0, 1, 1], [], []>} : vector<64x4xf32>, vector<4x64xf32>, vector<64x64xf32> -> vector<64x64xf32>
    %cst_34 = arith.constant dense<0xFF800000> : vector<64xf32>
    %81 = vector.multi_reduction <maximumf>, %80, %cst_34 [1] : vector<64x64xf32> to vector<64xf32>
    %82 = vector.shape_cast %81 : vector<64xf32> to vector<64x1xf32>
    %83 = vector.broadcast %82 : vector<64x1xf32> to vector<64x64xf32>
    %84 = arith.subf %80, %83 : vector<64x64xf32>
    %85 = math.exp %84 : vector<64x64xf32>
    %cst_35 = arith.constant dense<0.000000e+00> : vector<64xf32>
    %86 = vector.multi_reduction <add>, %85, %cst_35 [1] : vector<64x64xf32> to vector<64xf32>
    %87 = vector.shape_cast %86 : vector<64xf32> to vector<64x1xf32>
    %88 = tpu.reciprocal %87 {approx = true} : vector<64x1xf32> -> vector<64x1xf32>
    %89 = vector.broadcast %88 : vector<64x1xf32> to vector<64x64xf32>
    %90 = arith.mulf %85, %89 : vector<64x64xf32>
    %cst_36 = arith.constant dense<0.000000e+00> : vector<64x32xf32>
    %91 = tpu.matmul %90, %78, %cst_36 {dimension_numbers = #tpu.dot_dimension_numbers<[1], [0], [0], [1], [0, 0, 1, 1], [], []>} : vector<64x64xf32>, vector<64x32xf32>, vector<64x32xf32> -> vector<64x32xf32>
    %92 = tpu.transpose %91, [1, 0] : vector<64x32xf32> -> vector<32x64xf32>
    %c2_i32_37 = arith.constant 2 : i32
    %93 = vector.broadcast %c2_i32_37 : i32 to vector<64x32xi32>
    %94 = arith.muli %29, %93 : vector<64x32xi32>
    %c0_i32_38 = arith.constant 0 : i32
    %95 = vector.broadcast %c0_i32_38 : i32 to vector<64x32xi32>
    %96 = arith.addi %94, %95 : vector<64x32xi32>
    %97 = arith.cmpi eq, %28, %96 : vector<64x32xi32>
    %98 = arith.extui %97 : vector<64x32xi1> to vector<64x32xi32>
    %99 = arith.sitofp %98 : vector<64x32xi32> to vector<64x32xf32>
    %100 = vector.extract_strided_slice %92 {offsets = [0, 0], sizes = [32, 32], strides = [1, 1]} : vector<32x64xf32> to vector<32x32xf32>
    %cst_39 = arith.constant dense<0.000000e+00> : vector<64x32xf32>
    %101 = tpu.matmul %99, %100, %cst_39 {dimension_numbers = #tpu.dot_dimension_numbers<[1], [0], [0], [1], [0, 0, 1, 1], [], []>} : vector<64x32xf32>, vector<32x32xf32>, vector<64x32xf32> -> vector<64x32xf32>
    %c2_i32_40 = arith.constant 2 : i32
    %102 = vector.broadcast %c2_i32_40 : i32 to vector<64x32xi32>
    %103 = arith.muli %29, %102 : vector<64x32xi32>
    %c1_i32_41 = arith.constant 1 : i32
    %104 = vector.broadcast %c1_i32_41 : i32 to vector<64x32xi32>
    %105 = arith.addi %103, %104 : vector<64x32xi32>
    %106 = arith.cmpi eq, %28, %105 : vector<64x32xi32>
    %107 = arith.extui %106 : vector<64x32xi1> to vector<64x32xi32>
    %108 = arith.sitofp %107 : vector<64x32xi32> to vector<64x32xf32>
    %109 = vector.extract_strided_slice %92 {offsets = [0, 32], sizes = [32, 32], strides = [1, 1]} : vector<32x64xf32> to vector<32x32xf32>
    %cst_42 = arith.constant dense<0.000000e+00> : vector<64x32xf32>
    %110 = tpu.matmul %108, %109, %cst_42 {dimension_numbers = #tpu.dot_dimension_numbers<[1], [0], [0], [1], [0, 0, 1, 1], [], []>} : vector<64x32xf32>, vector<32x32xf32>, vector<64x32xf32> -> vector<64x32xf32>
    %111 = arith.addf %101, %110 : vector<64x32xf32>
    %112 = vector.broadcast %4 : vector<1x1xf32> to vector<64x32xf32>
    %113 = arith.mulf %112, %70 : vector<64x32xf32>
    %114 = arith.addf %113, %26 : vector<64x32xf32>
    %cst_43 = arith.constant dense<0.000000e+00> : vector<32xf32>
    %115 = vector.multi_reduction <add>, %114, %cst_43 [0] : vector<64x32xf32> to vector<32xf32>
    %116 = vector.shape_cast %115 : vector<32xf32> to vector<1x32xf32>
    %cst_44 = arith.constant 6.400000e+01 : f32
    %117 = vector.broadcast %cst_44 : f32 to vector<1x32xf32>
    %118 = arith.divf %116, %117 : vector<1x32xf32>
    %c288 = arith.constant 288 : index
    %c0_45 = arith.constant 0 : index
    %119 = vector.load %arg3[%c288, %c0_45] : memref<624x64xf32, #tpu.memory_space<vmem>>, vector<32x32xf32>
    %c320 = arith.constant 320 : index
    %c0_46 = arith.constant 0 : index
    %120 = vector.load %arg3[%c320, %c0_46] : memref<624x64xf32, #tpu.memory_space<vmem>>, vector<1x32xf32>
    %cst_47 = arith.constant dense<0.000000e+00> : vector<1x32xf32>
    %121 = tpu.matmul %118, %119, %cst_47 {dimension_numbers = #tpu.dot_dimension_numbers<[1], [0], [0], [1], [0, 0, 1, 1], [], []>} : vector<1x32xf32>, vector<32x32xf32>, vector<1x32xf32> -> vector<1x32xf32>
    %122 = arith.addf %121, %120 : vector<1x32xf32>
    %cst_48 = arith.constant 0.000000e+00 : f32
    %123 = vector.broadcast %cst_48 : f32 to vector<1x32xf32>
    %124 = arith.maximumf %122, %123 : vector<1x32xf32>
    %c328 = arith.constant 328 : index
    %c0_49 = arith.constant 0 : index
    %125 = vector.load %arg3[%c328, %c0_49] : memref<624x64xf32, #tpu.memory_space<vmem>>, vector<32x32xf32>
    %c360 = arith.constant 360 : index
    %c0_50 = arith.constant 0 : index
    %126 = vector.load %arg3[%c360, %c0_50] : memref<624x64xf32, #tpu.memory_space<vmem>>, vector<1x32xf32>
    %cst_51 = arith.constant dense<0.000000e+00> : vector<1x32xf32>
    %127 = tpu.matmul %124, %125, %cst_51 {dimension_numbers = #tpu.dot_dimension_numbers<[1], [0], [0], [1], [0, 0, 1, 1], [], []>} : vector<1x32xf32>, vector<32x32xf32>, vector<1x32xf32> -> vector<1x32xf32>
    %128 = arith.addf %127, %126 : vector<1x32xf32>
    %129 = vector.extract_strided_slice %128 {offsets = [0, 0], sizes = [1, 16], strides = [1, 1]} : vector<1x32xf32> to vector<1x16xf32>
    %130 = vector.extract_strided_slice %128 {offsets = [0, 16], sizes = [1, 16], strides = [1, 1]} : vector<1x32xf32> to vector<1x16xf32>
    %cst_52 = arith.constant 0.000000e+00 : f32
    %131 = vector.broadcast %cst_52 : f32 to vector<1x16xf32>
    %132 = arith.subf %131, %130 : vector<1x16xf32>
    %133 = math.exp %132 : vector<1x16xf32>
    %cst_53 = arith.constant 1.000000e+00 : f32
    %134 = vector.broadcast %cst_53 : f32 to vector<1x16xf32>
    %135 = arith.addf %134, %133 : vector<1x16xf32>
    %cst_54 = arith.constant 0.899999976 : f32
    %136 = vector.broadcast %cst_54 : f32 to vector<1x16xf32>
    %137 = arith.divf %136, %135 : vector<1x16xf32>
    %cst_55 = arith.constant 1.000000e-01 : f32
    %138 = vector.broadcast %cst_55 : f32 to vector<1x16xf32>
    %139 = arith.addf %138, %137 : vector<1x16xf32>
    %cst_56 = arith.constant 1.000000e-01 : f32
    %140 = vector.broadcast %cst_56 : f32 to vector<1x16xf32>
    %141 = arith.mulf %139, %140 : vector<1x16xf32>
    %c0_57 = arith.constant 0 : index
    %c0_58 = arith.constant 0 : index
    %c0_59 = arith.constant 0 : index
    %142 = vector.load %arg5[%c0_57, %c0_58, %c0_59] : memref<1x1x32xf32, #tpu.memory_space<vmem>>, vector<1x1x16xf32>
    %143 = vector.shape_cast %142 : vector<1x1x16xf32> to vector<1x16xf32>
    %144 = vector.shape_cast %129 : vector<1x16xf32> to vector<1x1x16xf32>
    tpu.vector_store %arg5[%c0_57, %c0_58, %c0_59], %144 {strides = array<i32>} : memref<1x1x32xf32, #tpu.memory_space<vmem>>, vector<1x1x16xf32>,
    %c0_60 = arith.constant 0 : index
    %c0_61 = arith.constant 0 : index
    %c16_62 = arith.constant 16 : index
    %145 = vector.load %arg5[%c0_60, %c0_61, %c16_62] : memref<1x1x32xf32, #tpu.memory_space<vmem>>, vector<1x1x16xf32>
    %146 = vector.shape_cast %145 : vector<1x1x16xf32> to vector<1x16xf32>
    %147 = vector.shape_cast %141 : vector<1x16xf32> to vector<1x1x16xf32>
    tpu.vector_store %arg5[%c0_60, %c0_61, %c16_62], %147 {strides = array<i32>} : memref<1x1x32xf32, #tpu.memory_space<vmem>>, vector<1x1x16xf32>,
    %148 = vector.broadcast %4 : vector<1x1xf32> to vector<64x32xf32>
    %149 = arith.mulf %148, %111 : vector<64x32xf32>
    %150 = arith.addf %149, %27 : vector<64x32xf32>
    %c200 = arith.constant 200 : index
    %c0_63 = arith.constant 0 : index
    %151 = vector.load %arg3[%c200, %c0_63] : memref<624x64xf32, #tpu.memory_space<vmem>>, vector<8x64xf32>
    %c208 = arith.constant 208 : index
    %c0_64 = arith.constant 0 : index
    %152 = vector.load %arg3[%c208, %c0_64] : memref<624x64xf32, #tpu.memory_space<vmem>>, vector<1x64xf32>
    %cst_65 = arith.constant dense<0.000000e+00> : vector<64x64xf32>
    %153 = tpu.matmul %1, %151, %cst_65 {dimension_numbers = #tpu.dot_dimension_numbers<[1], [0], [0], [1], [0, 0, 1, 1], [], []>} : vector<64x8xf32>, vector<8x64xf32>, vector<64x64xf32> -> vector<64x64xf32>
    %154 = vector.broadcast %152 : vector<1x64xf32> to vector<64x64xf32>
    %155 = arith.addf %153, %154 : vector<64x64xf32>
    %cst_66 = arith.constant 0.000000e+00 : f32
    %156 = vector.broadcast %cst_66 : f32 to vector<64x64xf32>
    %157 = arith.maximumf %155, %156 : vector<64x64xf32>
    %c216 = arith.constant 216 : index
    %c0_67 = arith.constant 0 : index
    %158 = vector.load %arg3[%c216, %c0_67] : memref<624x64xf32, #tpu.memory_space<vmem>>, vector<64x11xf32>
    %c280 = arith.constant 280 : index
    %c0_68 = arith.constant 0 : index
    %159 = vector.load %arg3[%c280, %c0_68] : memref<624x64xf32, #tpu.memory_space<vmem>>, vector<1x11xf32>
    %cst_69 = arith.constant dense<0.000000e+00> : vector<64x11xf32>
    %160 = tpu.matmul %157, %158, %cst_69 {dimension_numbers = #tpu.dot_dimension_numbers<[1], [0], [0], [1], [0, 0, 1, 1], [], []>} : vector<64x64xf32>, vector<64x11xf32>, vector<64x11xf32> -> vector<64x11xf32>
    %161 = vector.broadcast %159 : vector<1x11xf32> to vector<64x11xf32>
    %162 = arith.addf %160, %161 : vector<64x11xf32>
    %cst_70 = arith.constant 0.000000e+00 : f32
    %163 = vector.broadcast %cst_70 : f32 to vector<64x11xf32>
    %164 = arith.maximumf %162, %163 : vector<64x11xf32>
    %165 = vector.extract_strided_slice %164 {offsets = [0, 0], sizes = [64, 3], strides = [1, 1]} : vector<64x11xf32> to vector<64x3xf32>
    %166 = vector.extract_strided_slice %164 {offsets = [0, 8], sizes = [64, 3], strides = [1, 1]} : vector<64x11xf32> to vector<64x3xf32>
    %167 = tpu.transpose %165, [1, 0] : vector<64x3xf32> -> vector<3x64xf32>
    %cst_71 = arith.constant dense<0.000000e+00> : vector<64x64xf32>
    %168 = tpu.matmul %166, %167, %cst_71 {dimension_numbers = #tpu.dot_dimension_numbers<[1], [0], [0], [1], [0, 0, 1, 1], [], []>} : vector<64x3xf32>, vector<3x64xf32>, vector<64x64xf32> -> vector<64x64xf32>
    %cst_72 = arith.constant dense<0xFF800000> : vector<64xf32>
    %169 = vector.multi_reduction <maximumf>, %168, %cst_72 [1] : vector<64x64xf32> to vector<64xf32>
    %170 = vector.shape_cast %169 : vector<64xf32> to vector<64x1xf32>
    %171 = vector.broadcast %170 : vector<64x1xf32> to vector<64x64xf32>
    %172 = arith.subf %168, %171 : vector<64x64xf32>
    %173 = math.exp %172 : vector<64x64xf32>
    %cst_73 = arith.constant dense<0.000000e+00> : vector<64xf32>
    %174 = vector.multi_reduction <add>, %173, %cst_73 [1] : vector<64x64xf32> to vector<64xf32>
    %175 = vector.shape_cast %174 : vector<64xf32> to vector<64x1xf32>
    %176 = tpu.reciprocal %175 {approx = true} : vector<64x1xf32> -> vector<64x1xf32>
    %177 = vector.broadcast %176 : vector<64x1xf32> to vector<64x64xf32>
    %178 = arith.mulf %173, %177 : vector<64x64xf32>
    %cst_74 = arith.constant dense<0.000000e+00> : vector<64x32xf32>
    %179 = tpu.matmul %178, %150, %cst_74 {dimension_numbers = #tpu.dot_dimension_numbers<[1], [0], [0], [1], [0, 0, 1, 1], [], []>} : vector<64x64xf32>, vector<64x32xf32>, vector<64x32xf32> -> vector<64x32xf32>
    %c368 = arith.constant 368 : index
    %c0_75 = arith.constant 0 : index
    %180 = vector.load %arg3[%c368, %c0_75] : memref<624x64xf32, #tpu.memory_space<vmem>>, vector<32x16xf32>
    %c400 = arith.constant 400 : index
    %c0_76 = arith.constant 0 : index
    %181 = vector.load %arg3[%c400, %c0_76] : memref<624x64xf32, #tpu.memory_space<vmem>>, vector<1x16xf32>
    %cst_77 = arith.constant dense<0.000000e+00> : vector<64x16xf32>
    %182 = tpu.matmul %179, %180, %cst_77 {dimension_numbers = #tpu.dot_dimension_numbers<[1], [0], [0], [1], [0, 0, 1, 1], [], []>} : vector<64x32xf32>, vector<32x16xf32>, vector<64x16xf32> -> vector<64x16xf32>
    %183 = vector.broadcast %181 : vector<1x16xf32> to vector<64x16xf32>
    %184 = arith.addf %182, %183 : vector<64x16xf32>
    %c0_78 = arith.constant 0 : index
    %c0_79 = arith.constant 0 : index
    %c0_80 = arith.constant 0 : index
    %185 = vector.load %arg4[%c0_78, %c0_79, %c0_80] : memref<1x64x18xf32, #tpu.memory_space<vmem>>, vector<1x64x16xf32>
    %186 = vector.shape_cast %185 : vector<1x64x16xf32> to vector<64x16xf32>
    %187 = vector.shape_cast %184 : vector<64x16xf32> to vector<1x64x16xf32>
    tpu.vector_store %arg4[%c0_78, %c0_79, %c0_80], %187 {strides = array<i32>} : memref<1x64x18xf32, #tpu.memory_space<vmem>>, vector<1x64x16xf32>,
    %188 = arith.mulf %141, %3 : vector<1x16xf32>
    %189 = arith.addf %129, %188 : vector<1x16xf32>
    %c408 = arith.constant 408 : index
    %c0_81 = arith.constant 0 : index
    %190 = vector.load %arg3[%c408, %c0_81] : memref<624x64xf32, #tpu.memory_space<vmem>>, vector<16x32xf32>
    %c424 = arith.constant 424 : index
    %c0_82 = arith.constant 0 : index
    %191 = vector.load %arg3[%c424, %c0_82] : memref<624x64xf32, #tpu.memory_space<vmem>>, vector<16x32xf32>
    %c440 = arith.constant 440 : index
    %c0_83 = arith.constant 0 : index
    %192 = vector.load %arg3[%c440, %c0_83] : memref<624x64xf32, #tpu.memory_space<vmem>>, vector<8x32xf32>
    %c448 = arith.constant 448 : index
    %c0_84 = arith.constant 0 : index
    %193 = vector.load %arg3[%c448, %c0_84] : memref<624x64xf32, #tpu.memory_space<vmem>>, vector<1x32xf32>
    %cst_85 = arith.constant dense<0.000000e+00> : vector<64x32xf32>
    %194 = tpu.matmul %184, %190, %cst_85 {dimension_numbers = #tpu.dot_dimension_numbers<[1], [0], [0], [1], [0, 0, 1, 1], [], []>} : vector<64x16xf32>, vector<16x32xf32>, vector<64x32xf32> -> vector<64x32xf32>
    %cst_86 = arith.constant dense<0.000000e+00> : vector<1x32xf32>
    %195 = tpu.matmul %189, %191, %cst_86 {dimension_numbers = #tpu.dot_dimension_numbers<[1], [0], [0], [1], [0, 0, 1, 1], [], []>} : vector<1x16xf32>, vector<16x32xf32>, vector<1x32xf32> -> vector<1x32xf32>
    %196 = vector.broadcast %195 : vector<1x32xf32> to vector<64x32xf32>
    %197 = arith.addf %194, %196 : vector<64x32xf32>
    %cst_87 = arith.constant dense<0.000000e+00> : vector<64x32xf32>
    %198 = tpu.matmul %1, %192, %cst_87 {dimension_numbers = #tpu.dot_dimension_numbers<[1], [0], [0], [1], [0, 0, 1, 1], [], []>} : vector<64x8xf32>, vector<8x32xf32>, vector<64x32xf32> -> vector<64x32xf32>
    %199 = arith.addf %197, %198 : vector<64x32xf32>
    %200 = vector.broadcast %193 : vector<1x32xf32> to vector<64x32xf32>
    %201 = arith.addf %199, %200 : vector<64x32xf32>
    %cst_88 = arith.constant 0.000000e+00 : f32
    %202 = vector.broadcast %cst_88 : f32 to vector<64x32xf32>
    %203 = arith.maximumf %201, %202 : vector<64x32xf32>
    %c456 = arith.constant 456 : index
    %c0_89 = arith.constant 0 : index
    %204 = vector.load %arg3[%c456, %c0_89] : memref<624x64xf32, #tpu.memory_space<vmem>>, vector<32x32xf32>
    %c488 = arith.constant 488 : index
    %c0_90 = arith.constant 0 : index
    %205 = vector.load %arg3[%c488, %c0_90] : memref<624x64xf32, #tpu.memory_space<vmem>>, vector<1x32xf32>
    %cst_91 = arith.constant dense<0.000000e+00> : vector<64x32xf32>
    %206 = tpu.matmul %203, %204, %cst_91 {dimension_numbers = #tpu.dot_dimension_numbers<[1], [0], [0], [1], [0, 0, 1, 1], [], []>} : vector<64x32xf32>, vector<32x32xf32>, vector<64x32xf32> -> vector<64x32xf32>
    %207 = vector.broadcast %205 : vector<1x32xf32> to vector<64x32xf32>
    %208 = arith.addf %206, %207 : vector<64x32xf32>
    %cst_92 = arith.constant 0.000000e+00 : f32
    %209 = vector.broadcast %cst_92 : f32 to vector<64x32xf32>
    %210 = arith.maximumf %208, %209 : vector<64x32xf32>
    %c496 = arith.constant 496 : index
    %c0_93 = arith.constant 0 : index
    %211 = vector.load %arg3[%c496, %c0_93] : memref<624x64xf32, #tpu.memory_space<vmem>>, vector<32x32xf32>
    %c528 = arith.constant 528 : index
    %c0_94 = arith.constant 0 : index
    %212 = vector.load %arg3[%c528, %c0_94] : memref<624x64xf32, #tpu.memory_space<vmem>>, vector<1x32xf32>
    %cst_95 = arith.constant dense<0.000000e+00> : vector<64x32xf32>
    %213 = tpu.matmul %210, %211, %cst_95 {dimension_numbers = #tpu.dot_dimension_numbers<[1], [0], [0], [1], [0, 0, 1, 1], [], []>} : vector<64x32xf32>, vector<32x32xf32>, vector<64x32xf32> -> vector<64x32xf32>
    %214 = vector.broadcast %212 : vector<1x32xf32> to vector<64x32xf32>
    %215 = arith.addf %213, %214 : vector<64x32xf32>
    %cst_96 = arith.constant 0.000000e+00 : f32
    %216 = vector.broadcast %cst_96 : f32 to vector<64x32xf32>
    %217 = arith.maximumf %215, %216 : vector<64x32xf32>
    %c536 = arith.constant 536 : index
    %c0_97 = arith.constant 0 : index
    %218 = vector.load %arg3[%c536, %c0_97] : memref<624x64xf32, #tpu.memory_space<vmem>>, vector<32x32xf32>
    %c568 = arith.constant 568 : index
    %c0_98 = arith.constant 0 : index
    %219 = vector.load %arg3[%c568, %c0_98] : memref<624x64xf32, #tpu.memory_space<vmem>>, vector<1x32xf32>
    %cst_99 = arith.constant dense<0.000000e+00> : vector<64x32xf32>
    %220 = tpu.matmul %217, %218, %cst_99 {dimension_numbers = #tpu.dot_dimension_numbers<[1], [0], [0], [1], [0, 0, 1, 1], [], []>} : vector<64x32xf32>, vector<32x32xf32>, vector<64x32xf32> -> vector<64x32xf32>
    %221 = vector.broadcast %219 : vector<1x32xf32> to vector<64x32xf32>
    %222 = arith.addf %220, %221 : vector<64x32xf32>
    %cst_100 = arith.constant 0.000000e+00 : f32
    %223 = vector.broadcast %cst_100 : f32 to vector<64x32xf32>
    %224 = arith.maximumf %222, %223 : vector<64x32xf32>
    %c576 = arith.constant 576 : index
    %c0_101 = arith.constant 0 : index
    %225 = vector.load %arg3[%c576, %c0_101] : memref<624x64xf32, #tpu.memory_space<vmem>>, vector<32x2xf32>
    %c608 = arith.constant 608 : index
    %c0_102 = arith.constant 0 : index
    %226 = vector.load %arg3[%c608, %c0_102] : memref<624x64xf32, #tpu.memory_space<vmem>>, vector<1x2xf32>
    %cst_103 = arith.constant dense<0.000000e+00> : vector<64x2xf32>
    %227 = tpu.matmul %224, %225, %cst_103 {dimension_numbers = #tpu.dot_dimension_numbers<[1], [0], [0], [1], [0, 0, 1, 1], [], []>} : vector<64x32xf32>, vector<32x2xf32>, vector<64x2xf32> -> vector<64x2xf32>
    %228 = vector.broadcast %226 : vector<1x2xf32> to vector<64x2xf32>
    %229 = arith.addf %227, %228 : vector<64x2xf32>
    %cst_104 = arith.constant 0.000000e+00 : f32
    %230 = vector.broadcast %cst_104 : f32 to vector<64x2xf32>
    %231 = arith.maximumf %229, %230 : vector<64x2xf32>
    %232 = math.absf %229 : vector<64x2xf32>
    %cst_105 = arith.constant 0.000000e+00 : f32
    %233 = vector.broadcast %cst_105 : f32 to vector<64x2xf32>
    %234 = arith.subf %233, %232 : vector<64x2xf32>
    %235 = math.exp %234 : vector<64x2xf32>
    %cst_106 = arith.constant 1.000000e+00 : f32
    %236 = vector.broadcast %cst_106 : f32 to vector<64x2xf32>
    %237 = arith.addf %236, %235 : vector<64x2xf32>
    %238 = math.log %237 : vector<64x2xf32>
    %239 = arith.addf %231, %238 : vector<64x2xf32>
    %cst_107 = arith.constant 0.899999976 : f32
    %240 = vector.broadcast %cst_107 : f32 to vector<64x2xf32>
    %241 = arith.mulf %240, %239 : vector<64x2xf32>
    %cst_108 = arith.constant 1.000000e-01 : f32
    %242 = vector.broadcast %cst_108 : f32 to vector<64x2xf32>
    %243 = arith.addf %242, %241 : vector<64x2xf32>
    %244 = tpu.iota {dimensions = array<i32: 1>} : vector<64x2xi32>
    %c0_i32_109 = arith.constant 0 : i32
    %245 = vector.broadcast %c0_i32_109 : i32 to vector<64x2xi32>
    %246 = arith.cmpi eq, %244, %245 : vector<64x2xi32>
    %247 = arith.select %246, %229, %243 : vector<64x2xi1>, vector<64x2xf32>
    %c0_110 = arith.constant 0 : index
    %c0_111 = arith.constant 0 : index
    %c16_112 = arith.constant 16 : index
    %248 = vector.load %arg4[%c0_110, %c0_111, %c16_112] : memref<1x64x18xf32, #tpu.memory_space<vmem>>, vector<1x64x2xf32>
    %249 = vector.shape_cast %248 : vector<1x64x2xf32> to vector<64x2xf32>
    %250 = vector.shape_cast %247 : vector<64x2xf32> to vector<1x64x2xf32>
    tpu.vector_store %arg4[%c0_110, %c0_111, %c16_112], %250 {strides = array<i32>} : memref<1x64x18xf32, #tpu.memory_space<vmem>>, vector<1x64x2xf32>,
    return
  }
  func.func @transform_0(%arg0: i32) -> (i32, i32, i32) {
    %c0_i32 = arith.constant 0 : i32
    %c0_i32_0 = arith.constant 0 : i32
    %c0_i32_1 = arith.constant 0 : i32
    return %arg0, %c0_i32, %c0_i32_0 : i32, i32, i32
  }
  func.func @transform_1(%arg0: i32) -> (i32, i32, i32) {
    %c0_i32 = arith.constant 0 : i32
    %c0_i32_0 = arith.constant 0 : i32
    %c0_i32_1 = arith.constant 0 : i32
    return %arg0, %c0_i32, %c0_i32_0 : i32, i32, i32
  }
  func.func @transform_2(%arg0: i32) -> (i32, i32) {
    %c0_i32 = arith.constant 0 : i32
    %c0_i32_0 = arith.constant 0 : i32
    %c0_i32_1 = arith.constant 0 : i32
    return %c0_i32, %c0_i32_0 : i32, i32
  }
  func.func @transform_3(%arg0: i32) -> (i32, i32, i32) {
    %c0_i32 = arith.constant 0 : i32
    %c0_i32_0 = arith.constant 0 : i32
    %c0_i32_1 = arith.constant 0 : i32
    return %arg0, %c0_i32, %c0_i32_0 : i32, i32, i32
  }
  func.func @transform_4(%arg0: i32) -> (i32, i32, i32) {
    %c0_i32 = arith.constant 0 : i32
    %c0_i32_0 = arith.constant 0 : i32
    %c0_i32_1 = arith.constant 0 : i32
    return %arg0, %c0_i32, %c0_i32_0 : i32, i32, i32
  }
}

</mosaic_0001>

<llo_original>
// kernel: forward.1
$region0: #{forward.1}
  #allocation0 [shape = 'u32[]', space=smem, size = 0x4, offset = 0x4, fixed_abs, tag = 'smem constant byte address 0x4 - core index']
  #allocation1 [shape = 'u32[72,128]{1,0:T(1,128)}', space=vmem, size = 0x9000, scoped, tag = 'internal scratch']
  %s0 = inlined_call_operand.vmem [shape: f32[2,64,8], index: 0, kind: input, shape index: {}]
  %s1 = inlined_call_operand.vmem [shape: f32[2,1,16], index: 1, kind: input, shape index: {}]
  %s2 = inlined_call_operand.vmem [shape: f32[624,64], index: 2, kind: input, shape index: {}]
  %s3 = inlined_call_operand.vmem [shape: f32[2,64,18], index: 3, kind: output, shape index: {0}]
  %s4 = inlined_call_operand.vmem [shape: f32[2,1,32], index: 4, kind: output, shape index: {1}]
  %5 = xla_tuple %s3, %s4
  %s6 = sld [smem:[#allocation0]]
  $region53: #{forward.1} parent=0
    _
  %s8 = ssub.s32 1, %s6
  %s9 = scalar_select 0, %s8, %s6
  loop: start=0, step=1, limit=4
  $region2: #{forward.1} parent=0 // loop_pre_header
    _
  $region3: #{forward.1} parent=0 // loop_header
    %s11 = sphi 0, %s15
    %p12 = scmp.ge.s32.totalorder %s11, 4
    %s21 = sphi 0, %s23
    %s24 = sphi 0, %s21
    %s25 = sphi 0, %s24
    %s41 = sphi 0, %s25
    %s47 = sphi 0, %s49
    %s50 = sphi 0, %s47
    %s51 = sphi 0, %s50
    %s67 = sphi 0, %s51
    %s71 = sphi 0, %s71
    %s73 = sphi 0, %s71
    %s74 = sphi 0, %s73
    %s88 = sphi 0, %s74
    %s94 = sphi 0, %s96
    %s97 = sphi 0, %s94
    %s98 = sphi 0, %s97
    %s114 = sphi 0, %s98
    %s120 = sphi 0, %s122
    %s123 = sphi 0, %s120
    %s124 = sphi 0, %s123
    %s140 = sphi 0, %s124
  $region4: #{forward.1} parent=0 // loop_header_branch
    %14 = sbr.rel (%p12) target = $region8
  $region5: #{forward.1} parent=0 // loop_body
    %s16 = ssub.s32 %s11, 1
    %s17 = ssub.s32 %s11, 2
    %s18 = sadd.s32 %s11, 1
    %s19 = ssub.s32 %s11, %s18
    %p20 = scmp.eq.s32.totalorder %s19, 0
    %s22 = sadd.s32 %s21, 1
    %s23 = scalar_select %p20, %s21, %s22
    %p26 = pneg %p20
    %p27 = scmp.eq.s32.totalorder %s11, 1
    %p28 = por %p26, %p27
    %p29 = scmp.ne.s32.totalorder %s21, %s24
    %p30 = scmp.eq.s32.totalorder %s11, 0
    %p31 = por %p29, %p30
    %p32 = scmp.ne.s32.totalorder %s21, %s24
    %p33 = scmp.eq.s32.totalorder %s16, 1
    %p34 = por %p32, %p33
    %p35 = scmp.ne.s32.totalorder %s24, %s25
    %p36 = scmp.eq.s32.totalorder %s16, 0
    %p37 = por %p35, %p36
    %p38 = scmp.ne.s32.totalorder %s24, %s25
    %p39 = scmp.eq.s32.totalorder %s17, 1
    %p40 = por %p38, %p39
    %p42 = scmp.ne.s32.totalorder %s25, %s41
    %p43 = scmp.eq.s32.totalorder %s17, 0
    %p44 = por %p42, %p43
    %s45 = ssub.s32 %s11, %s18
    %p46 = scmp.eq.s32.totalorder %s45, 0
    %s48 = sadd.s32 %s47, 1
    %s49 = scalar_select %p46, %s47, %s48
    %p52 = pneg %p46
    %p53 = scmp.eq.s32.totalorder %s11, 1
    %p54 = por %p52, %p53
    %p55 = scmp.ne.s32.totalorder %s47, %s50
    %p56 = scmp.eq.s32.totalorder %s11, 0
    %p57 = por %p55, %p56
    %p58 = scmp.ne.s32.totalorder %s47, %s50
    %p59 = scmp.eq.s32.totalorder %s16, 1
    %p60 = por %p58, %p59
    %p61 = scmp.ne.s32.totalorder %s50, %s51
    %p62 = scmp.eq.s32.totalorder %s16, 0
    %p63 = por %p61, %p62
    %p64 = scmp.ne.s32.totalorder %s50, %s51
    %p65 = scmp.eq.s32.totalorder %s17, 1
    %p66 = por %p64, %p65
    %p68 = scmp.ne.s32.totalorder %s51, %s67
    %p69 = scmp.eq.s32.totalorder %s17, 0
    %p70 = por %p68, %p69
    %s72 = sadd.s32 %s71, 1
    %p75 = scmp.eq.s32.totalorder %s11, 1
    %p76 = scmp.ne.s32.totalorder %s71, %s73
    %p77 = scmp.eq.s32.totalorder %s11, 0
    %p78 = por %p76, %p77
    %p79 = scmp.ne.s32.totalorder %s71, %s73
    %p80 = scmp.eq.s32.totalorder %s16, 1
    %p81 = por %p79, %p80
    %p82 = scmp.ne.s32.totalorder %s73, %s74
    %p83 = scmp.eq.s32.totalorder %s16, 0
    %p84 = por %p82, %p83
    %p85 = scmp.ne.s32.totalorder %s73, %s74
    %p86 = scmp.eq.s32.totalorder %s17, 1
    %p87 = por %p85, %p86
    %p89 = scmp.ne.s32.totalorder %s74, %s88
    %p90 = scmp.eq.s32.totalorder %s17, 0
    %p91 = por %p89, %p90
    %s92 = ssub.s32 %s11, %s18
    %p93 = scmp.eq.s32.totalorder %s92, 0
    %s95 = sadd.s32 %s94, 1
    %s96 = scalar_select %p93, %s94, %s95
    %p99 = pneg %p93
    %p100 = scmp.eq.s32.totalorder %s11, 1
    %p101 = por %p99, %p100
    %p102 = scmp.ne.s32.totalorder %s94, %s97
    %p103 = scmp.eq.s32.totalorder %s11, 0
    %p104 = por %p102, %p103
    %p105 = scmp.ne.s32.totalorder %s94, %s97
    %p106 = scmp.eq.s32.totalorder %s16, 1
    %p107 = por %p105, %p106
    %p108 = scmp.ne.s32.totalorder %s97, %s98
    %p109 = scmp.eq.s32.totalorder %s16, 0
    %p110 = por %p108, %p109
    %p111 = scmp.ne.s32.totalorder %s97, %s98
    %p112 = scmp.eq.s32.totalorder %s17, 1
    %p113 = por %p111, %p112
    %p115 = scmp.ne.s32.totalorder %s98, %s114
    %p116 = scmp.eq.s32.totalorder %s17, 0
    %p117 = por %p115, %p116
    %s118 = ssub.s32 %s11, %s18
    %p119 = scmp.eq.s32.totalorder %s118, 0
    %s121 = sadd.s32 %s120, 1
    %s122 = scalar_select %p119, %s120, %s121
    %p125 = pneg %p119
    %p126 = scmp.eq.s32.totalorder %s11, 1
    %p127 = por %p125, %p126
    %p128 = scmp.ne.s32.totalorder %s120, %s123
    %p129 = scmp.eq.s32.totalorder %s11, 0
    %p130 = por %p128, %p129
    %p131 = scmp.ne.s32.totalorder %s120, %s123
    %p132 = scmp.eq.s32.totalorder %s16, 1
    %p133 = por %p131, %p132
    %p134 = scmp.ne.s32.totalorder %s123, %s124
    %p135 = scmp.eq.s32.totalorder %s16, 0
    %p136 = por %p134, %p135
    %p137 = scmp.ne.s32.totalorder %s123, %s124
    %p138 = scmp.eq.s32.totalorder %s17, 1
    %p139 = por %p137, %p138
    %p141 = scmp.ne.s32.totalorder %s124, %s140
    %p142 = scmp.eq.s32.totalorder %s17, 0
    %p143 = por %p141, %p142
    %p144 = scmp.le.s32.totalorder 1, %s11
    %p145 = scmp.lt.s32.totalorder %s11, 3
    %p146 = pnand %p144, %p145
    %p147 = pneg %p146
    // Predicated region
    $region9: #{forward.1} parent=5 // pred_check
      _
    $region10: #{forward.1} parent=5 // pred_check_branch
      %149 = sbr.rel (%p146) target = $region12
    $region11: #{forward.1} parent=5 // pred_region
      %s150 = ssub.s32 %s11, 1
      // Predicated region
      $region13: #{forward.1} parent=11 // pred_check
        %p151 = pneg %p84
      $region14: #{forward.1} parent=11 // pred_check_branch
        %153 = sbr.rel (%p151) target = $region16
      $region15: #{forward.1} parent=11 // pred_region
        _
      $region16: #{forward.1} parent=11 // pred_fallthru
        _
    $region12: #{forward.1} parent=5 // pred_fallthru
      _
    %p154 = scmp.lt.s32.totalorder %s11, 2
    // Predicated region
    $region17: #{forward.1} parent=5 // pred_check
      %p155 = pneg %p154
    $region18: #{forward.1} parent=5 // pred_check_branch
      %157 = sbr.rel (%p155) target = $region20
    $region19: #{forward.1} parent=5 // pred_region
      // Predicated region
      $region21: #{forward.1} parent=19 // pred_check
        %p158 = pneg %p31
      $region22: #{forward.1} parent=19 // pred_check_branch
        %160 = sbr.rel (%p158) target = $region24
      $region23: #{forward.1} parent=19 // pred_region
        %p161 = scmp.lt.s32.totalorder %s11, 1
        %s162 = scalar_select %p161, %s11, 1
        %s163 = smul.addr %s162, 8
        %s164 = smul.addr %s163, 8
        %s165 = scalar_lea.vmem %s0, %s164
      $region24: #{forward.1} parent=19 // pred_fallthru
        _
      // Predicated region
      $region25: #{forward.1} parent=19 // pred_check
        %p166 = pneg %p57
      $region26: #{forward.1} parent=19 // pred_check_branch
        %168 = sbr.rel (%p166) target = $region28
      $region27: #{forward.1} parent=19 // pred_region
        %p169 = scmp.lt.s32.totalorder %s11, 1
        %s170 = scalar_select %p169, %s11, 1
        %s171 = scalar_lea.vmem %s1, %s170
      $region28: #{forward.1} parent=19 // pred_fallthru
        _
    $region20: #{forward.1} parent=5 // pred_fallthru
      _
    %p172 = scmp.le.s32.totalorder 1, %s11
    %p173 = scmp.lt.s32.totalorder %s11, 3
    %p174 = pnand %p172, %p173
    %p175 = pneg %p174
    // Predicated region
    $region29: #{forward.1} parent=5 // pred_check
      _
    $region30: #{forward.1} parent=5 // pred_check_branch
      %177 = sbr.rel (%p174) target = $region32
    $region31: #{forward.1} parent=5 // pred_region
      %s178 = ssub.s32 %s11, 1
      %p179 = scmp.lt.s32.totalorder %s16, 1
      %s180 = scalar_select %p179, %s16, 1
      %s181 = smul.addr %s180, 8
      %s182 = smul.addr %s181, 8
      %s183 = scalar_lea.vmem %s0, %s182
      %p184 = pneg %p37
      %p185 = pneg %p34
      %p186 = scmp.lt.s32.totalorder %s16, 1
      %s187 = scalar_select %p186, %s16, 1
      %s188 = scalar_lea.vmem %s1, %s187
      %p189 = pneg %p63
      %p190 = pneg %p60
      %p191 = pneg %p84
      %p192 = pneg %p81
      %p193 = pneg %p110
      %p194 = pneg %p107
      %p195 = scmp.lt.s32.totalorder %s16, 1
      %s196 = scalar_select %p195, %s16, 1
      %s197 = smul.addr %s196, 8
      %s198 = smul.addr %s197, 8
      %s199 = scalar_lea.vmem %s3, %s198
      %p200 = pneg %p136
      %p201 = pneg %p133
      %p202 = scmp.lt.s32.totalorder %s16, 1
      %s203 = scalar_select %p202, %s16, 1
      %s204 = scalar_lea.vmem %s4, %s203
      %p205 = scmp.lt.s32.totalorder %s16, 1
      %s206 = scalar_select %p205, %s16, 1
      %s207 = smul.addr %s206, 8
      %s208 = smul.addr %s207, 8
      %s209 = scalar_lea.vmem %s0, %s208
      %p210 = scmp.lt.s32.totalorder %s16, 1
      %s211 = scalar_select %p210, %s16, 1
      %s212 = scalar_lea.vmem %s1, %s211
      %p213 = scmp.lt.s32.totalorder %s16, 1
      %s214 = scalar_select %p213, %s16, 1
      %s215 = smul.addr %s214, 8
      %s216 = smul.addr %s215, 8
      %s217 = scalar_lea.vmem %s3, %s216
      %p218 = scmp.lt.s32.totalorder %s16, 1
      %s219 = scalar_select %p218, %s16, 1
      %s220 = scalar_lea.vmem %s4, %s219
      %v221 = vld [vmem:[%s209] sm:$0xff]
      %v222 = vld [vmem:[%s209 + $0x8] sm:$0xff]
      %v223 = vld [vmem:[%s209 + $0x10] sm:$0xff]
      %v224 = vld [vmem:[%s209 + $0x18] sm:$0xff]
      %v225 = vld [vmem:[%s209 + $0x20] sm:$0xff]
      %v226 = vld [vmem:[%s209 + $0x28] sm:$0xff]
      %v227 = vld [vmem:[%s209 + $0x30] sm:$0xff]
      %v228 = vld [vmem:[%s209 + $0x38] sm:$0xff]
      %v229 = vld [vmem:[%s212] sm:$0x1]
      %v230 = vld [vmem:[%s2 + $0x268] sm:$0x1]
      %v231 = vld [vmem:[%s2] sm:$0xff]
      %v232 = vld [vmem:[%s2 + $0x8] sm:$0x1]
      %v233 = vperm.slane %v232, 0
      %vm234 = vcmask 64512
      %v236 = vsel %vm234, %v221, 0
      %v239 = vsel %vm234, %v222, 0
      %v242 = vsel %vm234, %v223, 0
      %v245 = vsel %vm234, %v224, 0
      %v248 = vsel %vm234, %v225, 0
      %v251 = vsel %vm234, %v226, 0
      %v254 = vsel %vm234, %v227, 0
      %v257 = vsel %vm234, %v228, 0
      %259 = vmatpush.msra.mxu0 0.0
      %260 = vmatpush.msra.mxu0 0.0
      %261 = vmatpush.msra.mxu0 0.0
      %262 = vmatpush.msra.mxu0 0.0
      %263 = vmatpush.msra.mxu0 0.0
      %264 = vmatpush.msra.mxu0 0.0
      %265 = vmatpush.msra.mxu0 0.0
      %266 = vmatpush.msra.mxu0 0.0
      %267 = vmatpush.msra.mxu0 0.0
      %268 = vmatpush.msra.mxu0 0.0
      %269 = vmatpush.msra.mxu0 0.0
      %270 = vmatpush.msra.mxu0 0.0
      %271 = vmatpush.msra.mxu0 0.0
      %272 = vmatpush.msra.mxu0 0.0
      %273 = vmatpush.msra.mxu0 0.0
      %274 = vmatpush.msra.mxu0 %v231
      %275 = vmatmul.f32.gmra.mxu0 %v236
      %v276 = vpop.f32.mrf.mxu0
      %v277 = vadd.f32 %v233, %v276
      %278 = vmatmul.f32.gmra.mxu0 %v239
      %v279 = vpop.f32.mrf.mxu0
      %v280 = vadd.f32 %v233, %v279
      %281 = vmatmul.f32.gmra.mxu0 %v242
      %v282 = vpop.f32.mrf.mxu0
      %v283 = vadd.f32 %v233, %v282
      %284 = vmatmul.f32.gmra.mxu0 %v245
      %v285 = vpop.f32.mrf.mxu0
      %v286 = vadd.f32 %v233, %v285
      %287 = vmatmul.f32.gmra.mxu0 %v248
      %v288 = vpop.f32.mrf.mxu0
      %v289 = vadd.f32 %v233, %v288
      %290 = vmatmul.f32.gmra.mxu0 %v251
      %v291 = vpop.f32.mrf.mxu0
      %v292 = vadd.f32 %v233, %v291
      %293 = vmatmul.f32.gmra.mxu0 %v254
      %v294 = vpop.f32.mrf.mxu0
      %v295 = vadd.f32 %v233, %v294
      %296 = vmatmul.f32.gmra.mxu0 %v257
      %v297 = vpop.f32.mrf.mxu0
      %v298 = vadd.f32 %v233, %v297
      %299 = vdwg.mxu0
      %v300 = vmax.f32 %v277, 0.0
      %v301 = vmax.f32 %v280, 0.0
      %v302 = vmax.f32 %v283, 0.0
      %v303 = vmax.f32 %v286, 0.0
      %v304 = vmax.f32 %v289, 0.0
      %v305 = vmax.f32 %v292, 0.0
      %v306 = vmax.f32 %v295, 0.0
      %v307 = vmax.f32 %v298, 0.0
      %v308 = vld [vmem:[%s2 + $0x10] sm:$0xff]
      %v309 = vld [vmem:[%s2 + $0x18] sm:$0xff]
      %v310 = vld [vmem:[%s2 + $0x20] sm:$0xff]
      %v311 = vld [vmem:[%s2 + $0x28] sm:$0xff]
      %v312 = vld [vmem:[%s2 + $0x30] sm:$0xff]
      %v313 = vld [vmem:[%s2 + $0x38] sm:$0xff]
      %v314 = vld [vmem:[%s2 + $0x40] sm:$0xff]
      %v315 = vld [vmem:[%s2 + $0x48] sm:$0xff]
      %v316 = vld [vmem:[%s2 + $0x50] sm:$0x1]
      %v317 = vperm.slane %v316, 0
      %vm318 = vcmask 523264
      %v320 = vsel %vm318, %v300, 0
      %v323 = vsel %vm318, %v301, 0
      %v326 = vsel %vm318, %v302, 0
      %v329 = vsel %vm318, %v303, 0
      %v332 = vsel %vm318, %v304, 0
      %v335 = vsel %vm318, %v305, 0
      %v338 = vsel %vm318, %v306, 0
      %v341 = vsel %vm318, %v307, 0
      %343 = vmatpush.msra.mxu0 0.0
      %344 = vmatpush.msra.mxu0 0.0
      %345 = vmatpush.msra.mxu0 0.0
      %346 = vmatpush.msra.mxu0 0.0
      %347 = vmatpush.msra.mxu0 0.0
      %348 = vmatpush.msra.mxu0 0.0
      %349 = vmatpush.msra.mxu0 0.0
      %350 = vmatpush.msra.mxu0 0.0
      %351 = vmatpush.msra.mxu0 %v315
      %352 = vmatpush.msra.mxu0 %v314
      %353 = vmatpush.msra.mxu0 %v313
      %354 = vmatpush.msra.mxu0 %v312
      %355 = vmatpush.msra.mxu0 %v311
      %356 = vmatpush.msra.mxu0 %v310
      %357 = vmatpush.msra.mxu0 %v309
      %358 = vmatpush.msra.mxu0 %v308
      %359 = vmatmul.f32.gmra.mxu0 %v320
      %v360 = vpop.f32.mrf.mxu0
      %v361 = vadd.f32 %v317, %v360
      %362 = vmatmul.f32.gmra.mxu0 %v323
      %v363 = vpop.f32.mrf.mxu0
      %v364 = vadd.f32 %v317, %v363
      %365 = vmatmul.f32.gmra.mxu0 %v326
      %v366 = vpop.f32.mrf.mxu0
      %v367 = vadd.f32 %v317, %v366
      %368 = vmatmul.f32.gmra.mxu0 %v329
      %v369 = vpop.f32.mrf.mxu0
      %v370 = vadd.f32 %v317, %v369
      %371 = vmatmul.f32.gmra.mxu0 %v332
      %v372 = vpop.f32.mrf.mxu0
      %v373 = vadd.f32 %v317, %v372
      %374 = vmatmul.f32.gmra.mxu0 %v335
      %v375 = vpop.f32.mrf.mxu0
      %v376 = vadd.f32 %v317, %v375
      %377 = vmatmul.f32.gmra.mxu0 %v338
      %v378 = vpop.f32.mrf.mxu0
      %v379 = vadd.f32 %v317, %v378
      %380 = vmatmul.f32.gmra.mxu0 %v341
      %v381 = vpop.f32.mrf.mxu0
      %v382 = vadd.f32 %v317, %v381
      %383 = vdwg.mxu0
      %v384 = vmax.f32 %v361, 0.0
      %v385 = vmax.f32 %v364, 0.0
      %v386 = vmax.f32 %v367, 0.0
      %v387 = vmax.f32 %v370, 0.0
      %v388 = vmax.f32 %v373, 0.0
      %v389 = vmax.f32 %v376, 0.0
      %v390 = vmax.f32 %v379, 0.0
      %v391 = vmax.f32 %v382, 0.0
      %v392 = vld [vmem:[%s2 + $0x58] sm:$0xff]
      %v393 = vld [vmem:[%s2 + $0x60] sm:$0xff]
      %v394 = vld [vmem:[%s2 + $0x68] sm:$0xff]
      %v395 = vld [vmem:[%s2 + $0x70] sm:$0xff]
      %v396 = vld [vmem:[%s2 + $0x78] sm:$0xff]
      %v397 = vld [vmem:[%s2 + $0x80] sm:$0xff]
      %v398 = vld [vmem:[%s2 + $0x88] sm:$0xff]
      %v399 = vld [vmem:[%s2 + $0x90] sm:$0xff]
      %v400 = vld [vmem:[%s2 + $0x98] sm:$0x1]
      %v401 = vperm.slane %v400, 0
      %v403 = vsel %vm318, %v384, 0
      %v406 = vsel %vm318, %v385, 0
      %v409 = vsel %vm318, %v386, 0
      %v412 = vsel %vm318, %v387, 0
      %v415 = vsel %vm318, %v388, 0
      %v418 = vsel %vm318, %v389, 0
      %v421 = vsel %vm318, %v390, 0
      %v424 = vsel %vm318, %v391, 0
      %426 = vmatpush.msra.mxu0 0.0
      %427 = vmatpush.msra.mxu0 0.0
      %428 = vmatpush.msra.mxu0 0.0
      %429 = vmatpush.msra.mxu0 0.0
      %430 = vmatpush.msra.mxu0 0.0
      %431 = vmatpush.msra.mxu0 0.0
      %432 = vmatpush.msra.mxu0 0.0
      %433 = vmatpush.msra.mxu0 0.0
      %434 = vmatpush.msra.mxu0 %v399
      %435 = vmatpush.msra.mxu0 %v398
      %436 = vmatpush.msra.mxu0 %v397
      %437 = vmatpush.msra.mxu0 %v396
      %438 = vmatpush.msra.mxu0 %v395
      %439 = vmatpush.msra.mxu0 %v394
      %440 = vmatpush.msra.mxu0 %v393
      %441 = vmatpush.msra.mxu0 %v392
      %442 = vmatmul.f32.gmra.mxu0 %v403
      %v443 = vpop.f32.mrf.mxu0
      %v444 = vadd.f32 %v401, %v443
      %445 = vmatmul.f32.gmra.mxu0 %v406
      %v446 = vpop.f32.mrf.mxu0
      %v447 = vadd.f32 %v401, %v446
      %448 = vmatmul.f32.gmra.mxu0 %v409
      %v449 = vpop.f32.mrf.mxu0
      %v450 = vadd.f32 %v401, %v449
      %451 = vmatmul.f32.gmra.mxu0 %v412
      %v452 = vpop.f32.mrf.mxu0
      %v453 = vadd.f32 %v401, %v452
      %454 = vmatmul.f32.gmra.mxu0 %v415
      %v455 = vpop.f32.mrf.mxu0
      %v456 = vadd.f32 %v401, %v455
      %457 = vmatmul.f32.gmra.mxu0 %v418
      %v458 = vpop.f32.mrf.mxu0
      %v459 = vadd.f32 %v401, %v458
      %460 = vmatmul.f32.gmra.mxu0 %v421
      %v461 = vpop.f32.mrf.mxu0
      %v462 = vadd.f32 %v401, %v461
      %463 = vmatmul.f32.gmra.mxu0 %v424
      %v464 = vpop.f32.mrf.mxu0
      %v465 = vadd.f32 %v401, %v464
      %466 = vdwg.mxu0
      %v467 = vmax.f32 %v444, 0.0
      %v468 = vmax.f32 %v447, 0.0
      %v469 = vmax.f32 %v450, 0.0
      %v470 = vmax.f32 %v453, 0.0
      %v471 = vmax.f32 %v456, 0.0
      %v472 = vmax.f32 %v459, 0.0
      %v473 = vmax.f32 %v462, 0.0
      %v474 = vmax.f32 %v465, 0.0
      %v475 = vlaneseq
      %v476 = vshrl.u32 %v475, 7
      %v477 = vadd.s32 %v476, 8
      %v478 = vadd.s32 %v476, 16
      %v479 = vadd.s32 %v476, 24
      %v480 = vadd.s32 %v476, 32
      %v481 = vadd.s32 %v476, 40
      %v482 = vadd.s32 %v476, 48
      %v483 = vadd.s32 %v476, 56
      %v484 = vlaneseq
      %v485 = vand.u32 %v484, 127
      %v486 = vld [vmem:[%s2 + $0xa0] sm:$0xff]
      %v487 = vld [vmem:[%s2 + $0xa8] sm:$0xff]
      %v488 = vld [vmem:[%s2 + $0xb0] sm:$0xff]
      %v489 = vld [vmem:[%s2 + $0xb8] sm:$0xff]
      %v490 = vld [vmem:[%s2 + $0xc0] sm:$0x1]
      %v491 = vperm.slane %v490, 0
      %vm492 = vcmask 261120
      %v494 = vsel %vm492, %v467, 0
      %v497 = vsel %vm492, %v468, 0
      %v500 = vsel %vm492, %v469, 0
      %v503 = vsel %vm492, %v470, 0
      %v506 = vsel %vm492, %v471, 0
      %v509 = vsel %vm492, %v472, 0
      %v512 = vsel %vm492, %v473, 0
      %v515 = vsel %vm492, %v474, 0
      %517 = vmatpush.msra.mxu0 0.0
      %518 = vmatpush.msra.mxu0 0.0
      %519 = vmatpush.msra.mxu0 0.0
      %520 = vmatpush.msra.mxu0 0.0
      %521 = vmatpush.msra.mxu0 0.0
      %522 = vmatpush.msra.mxu0 0.0
      %523 = vmatpush.msra.mxu0 0.0
      %524 = vmatpush.msra.mxu0 0.0
      %525 = vmatpush.msra.mxu0 0.0
      %526 = vmatpush.msra.mxu0 0.0
      %527 = vmatpush.msra.mxu0 0.0
      %528 = vmatpush.msra.mxu0 0.0
      %529 = vmatpush.msra.mxu0 %v489
      %530 = vmatpush.msra.mxu0 %v488
      %531 = vmatpush.msra.mxu0 %v487
      %532 = vmatpush.msra.mxu0 %v486
      %533 = vmatmul.f32.gmra.mxu0 %v494
      %v534 = vpop.f32.mrf.mxu0
      %v535 = vadd.f32 %v491, %v534
      %536 = vmatmul.f32.gmra.mxu0 %v497
      %v537 = vpop.f32.mrf.mxu0
      %v538 = vadd.f32 %v491, %v537
      %539 = vmatmul.f32.gmra.mxu0 %v500
      %v540 = vpop.f32.mrf.mxu0
      %v541 = vadd.f32 %v491, %v540
      %542 = vmatmul.f32.gmra.mxu0 %v503
      %v543 = vpop.f32.mrf.mxu0
      %v544 = vadd.f32 %v491, %v543
      %545 = vmatmul.f32.gmra.mxu0 %v506
      %v546 = vpop.f32.mrf.mxu0
      %v547 = vadd.f32 %v491, %v546
      %548 = vmatmul.f32.gmra.mxu0 %v509
      %v549 = vpop.f32.mrf.mxu0
      %v550 = vadd.f32 %v491, %v549
      %551 = vmatmul.f32.gmra.mxu0 %v512
      %v552 = vpop.f32.mrf.mxu0
      %v553 = vadd.f32 %v491, %v552
      %554 = vmatmul.f32.gmra.mxu0 %v515
      %v555 = vpop.f32.mrf.mxu0
      %v556 = vadd.f32 %v491, %v555
      %557 = vdwg.mxu0
      %566 = vrot.lane.b32.xlu0 %v535, 120
      %v567 = vpop.permute.xlu0 %566
      %568 = vrot.lane.b32.xlu0 %v538, 120
      %v569 = vpop.permute.xlu0 %568
      %570 = vrot.lane.b32.xlu0 %v541, 120
      %v571 = vpop.permute.xlu0 %570
      %572 = vrot.lane.b32.xlu0 %v544, 120
      %v573 = vpop.permute.xlu0 %572
      %574 = vrot.lane.b32.xlu0 %v547, 120
      %v575 = vpop.permute.xlu0 %574
      %576 = vrot.lane.b32.xlu0 %v550, 120
      %v577 = vpop.permute.xlu0 %576
      %578 = vrot.lane.b32.xlu0 %v553, 120
      %v579 = vpop.permute.xlu0 %578
      %580 = vrot.lane.b32.xlu0 %v556, 120
      %v581 = vpop.permute.xlu0 %580
      %vm582 = vcmask 31744
      %v583 = vsel %vm582, %v535, 0
      %v585 = vsel %vm582, %v538, 0
      %v587 = vsel %vm582, %v541, 0
      %v589 = vsel %vm582, %v544, 0
      %v591 = vsel %vm582, %v547, 0
      %v593 = vsel %vm582, %v550, 0
      %v595 = vsel %vm582, %v553, 0
      %v597 = vsel %vm582, %v556, 0
      %v599 = vsel %vm582, %v567, 0
      %v601 = vsel %vm582, %v569, 0
      %v603 = vsel %vm582, %v571, 0
      %v605 = vsel %vm582, %v573, 0
      %v607 = vsel %vm582, %v575, 0
      %v609 = vsel %vm582, %v577, 0
      %v611 = vsel %vm582, %v579, 0
      %v613 = vsel %vm582, %v581, 0
      %615 = vmatpush.xpose.msra.mxu0 0.0
      %616 = vmatpush.xpose.msra.mxu0 0.0
      %617 = vmatpush.xpose.msra.mxu0 0.0
      %618 = vmatpush.xpose.msra.mxu0 0.0
      %619 = vmatpush.xpose.msra.mxu0 0.0
      %620 = vmatpush.xpose.msra.mxu0 0.0
      %621 = vmatpush.xpose.msra.mxu0 0.0
      %622 = vmatpush.xpose.msra.mxu0 0.0
      %623 = vmatpush.xpose.msra.mxu0 %v613
      %624 = vmatpush.xpose.msra.mxu0 %v611
      %625 = vmatpush.xpose.msra.mxu0 %v609
      %626 = vmatpush.xpose.msra.mxu0 %v607
      %627 = vmatpush.xpose.msra.mxu0 %v605
      %628 = vmatpush.xpose.msra.mxu0 %v603
      %629 = vmatpush.xpose.msra.mxu0 %v601
      %630 = vmatpush.xpose.msra.mxu0 %v599
      %631 = vmatmul.f32.gmra.mxu0 %v583
      %v632 = vpop.f32.mrf.mxu0
      %v633 = vadd.f32 0.0, %v632
      %634 = vmatmul.f32.gmra.mxu0 %v585
      %v635 = vpop.f32.mrf.mxu0
      %v636 = vadd.f32 0.0, %v635
      %637 = vmatmul.f32.gmra.mxu0 %v587
      %v638 = vpop.f32.mrf.mxu0
      %v639 = vadd.f32 0.0, %v638
      %640 = vmatmul.f32.gmra.mxu0 %v589
      %v641 = vpop.f32.mrf.mxu0
      %v642 = vadd.f32 0.0, %v641
      %643 = vmatmul.f32.gmra.mxu0 %v591
      %v644 = vpop.f32.mrf.mxu0
      %v645 = vadd.f32 0.0, %v644
      %646 = vmatmul.f32.gmra.mxu0 %v593
      %v647 = vpop.f32.mrf.mxu0
      %v648 = vadd.f32 0.0, %v647
      %649 = vmatmul.f32.gmra.mxu0 %v595
      %v650 = vpop.f32.mrf.mxu0
      %v651 = vadd.f32 0.0, %v650
      %652 = vmatmul.f32.gmra.mxu0 %v597
      %v653 = vpop.f32.mrf.mxu0
      %v654 = vadd.f32 0.0, %v653
      %655 = vdwg.mxu0
      %v656 = vsel %vm318, %v633, -inf
      %657 = vmax.xlane.f32.xlu0 %v656
      %v658 = vpop.xlane.xlu0 %657
      %v659 = vsel %vm318, %v636, -inf
      %660 = vmax.xlane.f32.xlu0 %v659
      %v661 = vpop.xlane.xlu0 %660
      %v662 = vsel %vm318, %v639, -inf
      %663 = vmax.xlane.f32.xlu0 %v662
      %v664 = vpop.xlane.xlu0 %663
      %v665 = vsel %vm318, %v642, -inf
      %666 = vmax.xlane.f32.xlu0 %v665
      %v667 = vpop.xlane.xlu0 %666
      %v668 = vsel %vm318, %v645, -inf
      %669 = vmax.xlane.f32.xlu0 %v668
      %v670 = vpop.xlane.xlu0 %669
      %v671 = vsel %vm318, %v648, -inf
      %672 = vmax.xlane.f32.xlu0 %v671
      %v673 = vpop.xlane.xlu0 %672
      %v674 = vsel %vm318, %v651, -inf
      %675 = vmax.xlane.f32.xlu0 %v674
      %v676 = vpop.xlane.xlu0 %675
      %v677 = vsel %vm318, %v654, -inf
      %678 = vmax.xlane.f32.xlu0 %v677
      %v679 = vpop.xlane.xlu0 %678
      %v680 = vsub.f32 %v633, %v658
      %v681 = vsub.f32 %v636, %v661
      %v682 = vsub.f32 %v639, %v664
      %v683 = vsub.f32 %v642, %v667
      %v684 = vsub.f32 %v645, %v670
      %v685 = vsub.f32 %v648, %v673
      %v686 = vsub.f32 %v651, %v676
      %v687 = vsub.f32 %v654, %v679
      %v688 = vmul.f32 %v680, 1.442695
      %v689 = vpow.pop %v688
      %v690 = vmul.f32 %v681, 1.442695
      %v691 = vpow.pop %v690
      %v692 = vmul.f32 %v682, 1.442695
      %v693 = vpow.pop %v692
      %v694 = vmul.f32 %v683, 1.442695
      %v695 = vpow.pop %v694
      %v696 = vmul.f32 %v684, 1.442695
      %v697 = vpow.pop %v696
      %v698 = vmul.f32 %v685, 1.442695
      %v699 = vpow.pop %v698
      %v700 = vmul.f32 %v686, 1.442695
      %v701 = vpow.pop %v700
      %v702 = vmul.f32 %v687, 1.442695
      %v703 = vpow.pop %v702
      %v704 = vsel %vm318, %v689, 0.0
      %705 = vadd.xlane.f32.xlu0 %v704
      %v706 = vpop.xlane.xlu0 %705
      %v707 = vsel %vm318, %v691, 0.0
      %708 = vadd.xlane.f32.xlu0 %v707
      %v709 = vpop.xlane.xlu0 %708
      %v710 = vsel %vm318, %v693, 0.0
      %711 = vadd.xlane.f32.xlu0 %v710
      %v712 = vpop.xlane.xlu0 %711
      %v713 = vsel %vm318, %v695, 0.0
      %714 = vadd.xlane.f32.xlu0 %v713
      %v715 = vpop.xlane.xlu0 %714
      %v716 = vsel %vm318, %v697, 0.0
      %717 = vadd.xlane.f32.xlu0 %v716
      %v718 = vpop.xlane.xlu0 %717
      %v719 = vsel %vm318, %v699, 0.0
      %720 = vadd.xlane.f32.xlu0 %v719
      %v721 = vpop.xlane.xlu0 %720
      %v722 = vsel %vm318, %v701, 0.0
      %723 = vadd.xlane.f32.xlu0 %v722
      %v724 = vpop.xlane.xlu0 %723
      %v725 = vsel %vm318, %v703, 0.0
      %726 = vadd.xlane.f32.xlu0 %v725
      %v727 = vpop.xlane.xlu0 %726
      %v728 = vrcp.pop %v706
      %v729 = vrcp.pop %v709
      %v730 = vrcp.pop %v712
      %v731 = vrcp.pop %v715
      %v732 = vrcp.pop %v718
      %v733 = vrcp.pop %v721
      %v734 = vrcp.pop %v724
      %v735 = vrcp.pop %v727
      %v736 = vmul.f32 %v689, %v728
      %v737 = vmul.f32 %v691, %v729
      %v738 = vmul.f32 %v693, %v730
      %v739 = vmul.f32 %v695, %v731
      %v740 = vmul.f32 %v697, %v732
      %v741 = vmul.f32 %v699, %v733
      %v742 = vmul.f32 %v701, %v734
      %v743 = vmul.f32 %v703, %v735
      %744 = vrot.lane.b32.xlu0 %v535, 112
      %v745 = vpop.permute.xlu0 %744
      %746 = vrot.lane.b32.xlu0 %v538, 112
      %v747 = vpop.permute.xlu0 %746
      %748 = vrot.lane.b32.xlu0 %v541, 112
      %v749 = vpop.permute.xlu0 %748
      %750 = vrot.lane.b32.xlu0 %v544, 112
      %v751 = vpop.permute.xlu0 %750
      %752 = vrot.lane.b32.xlu0 %v547, 112
      %v753 = vpop.permute.xlu0 %752
      %754 = vrot.lane.b32.xlu0 %v550, 112
      %v755 = vpop.permute.xlu0 %754
      %756 = vrot.lane.b32.xlu0 %v553, 112
      %v757 = vpop.permute.xlu0 %756
      %758 = vrot.lane.b32.xlu0 %v556, 112
      %v759 = vpop.permute.xlu0 %758
      %v769 = vsel %vm318, %v736, 0
      %v772 = vsel %vm318, %v737, 0
      %v775 = vsel %vm318, %v738, 0
      %v778 = vsel %vm318, %v739, 0
      %v781 = vsel %vm318, %v740, 0
      %v784 = vsel %vm318, %v741, 0
      %v787 = vsel %vm318, %v742, 0
      %v790 = vsel %vm318, %v743, 0
      %792 = vmatpush.msra.mxu0 0.0
      %793 = vmatpush.msra.mxu0 0.0
      %794 = vmatpush.msra.mxu0 0.0
      %795 = vmatpush.msra.mxu0 0.0
      %796 = vmatpush.msra.mxu0 0.0
      %797 = vmatpush.msra.mxu0 0.0
      %798 = vmatpush.msra.mxu0 0.0
      %799 = vmatpush.msra.mxu0 0.0
      %800 = vmatpush.msra.mxu0 %v759
      %801 = vmatpush.msra.mxu0 %v757
      %802 = vmatpush.msra.mxu0 %v755
      %803 = vmatpush.msra.mxu0 %v753
      %804 = vmatpush.msra.mxu0 %v751
      %805 = vmatpush.msra.mxu0 %v749
      %806 = vmatpush.msra.mxu0 %v747
      %807 = vmatpush.msra.mxu0 %v745
      %808 = vmatmul.f32.gmra.mxu0 %v769
      %v809 = vpop.f32.mrf.mxu0
      %v810 = vadd.f32 0.0, %v809
      %811 = vmatmul.f32.gmra.mxu0 %v772
      %v812 = vpop.f32.mrf.mxu0
      %v813 = vadd.f32 0.0, %v812
      %814 = vmatmul.f32.gmra.mxu0 %v775
      %v815 = vpop.f32.mrf.mxu0
      %v816 = vadd.f32 0.0, %v815
      %817 = vmatmul.f32.gmra.mxu0 %v778
      %v818 = vpop.f32.mrf.mxu0
      %v819 = vadd.f32 0.0, %v818
      %820 = vmatmul.f32.gmra.mxu0 %v781
      %v821 = vpop.f32.mrf.mxu0
      %v822 = vadd.f32 0.0, %v821
      %823 = vmatmul.f32.gmra.mxu0 %v784
      %v824 = vpop.f32.mrf.mxu0
      %v825 = vadd.f32 0.0, %v824
      %826 = vmatmul.f32.gmra.mxu0 %v787
      %v827 = vpop.f32.mrf.mxu0
      %v828 = vadd.f32 0.0, %v827
      %829 = vmatmul.f32.gmra.mxu0 %v790
      %v830 = vpop.f32.mrf.mxu0
      %v831 = vadd.f32 0.0, %v830
      %832 = vdwg.mxu0
      %v833 = vmul.u32 %v485, 2
      %vm834 = vcmp.eq.s32.totalorder %v476, %v833
      %vm835 = vcmp.eq.s32.totalorder %v477, %v833
      %vm836 = vcmp.eq.s32.totalorder %v478, %v833
      %vm837 = vcmp.eq.s32.totalorder %v479, %v833
      %vm838 = vcmp.eq.s32.totalorder %v480, %v833
      %vm839 = vcmp.eq.s32.totalorder %v481, %v833
      %vm840 = vcmp.eq.s32.totalorder %v482, %v833
      %vm841 = vcmp.eq.s32.totalorder %v483, %v833
      %v842 = vsel %vm834, 1, 0
      %v843 = vsel %vm835, 1, 0
      %v844 = vsel %vm836, 1, 0
      %v845 = vsel %vm837, 1, 0
      %v846 = vsel %vm838, 1, 0
      %v847 = vsel %vm839, 1, 0
      %v848 = vsel %vm840, 1, 0
      %v849 = vsel %vm841, 1, 0
      %v850 = vcvt.s32.f32 %v842
      %v851 = vcvt.s32.f32 %v843
      %v852 = vcvt.s32.f32 %v844
      %v853 = vcvt.s32.f32 %v845
      %v854 = vcvt.s32.f32 %v846
      %v855 = vcvt.s32.f32 %v847
      %v856 = vcvt.s32.f32 %v848
      %v857 = vcvt.s32.f32 %v849
      %v858 = vadd.s32 %v833, 1
      %vm859 = vcmp.eq.s32.totalorder %v476, %v858
      %vm860 = vcmp.eq.s32.totalorder %v477, %v858
      %vm861 = vcmp.eq.s32.totalorder %v478, %v858
      %vm862 = vcmp.eq.s32.totalorder %v479, %v858
      %vm863 = vcmp.eq.s32.totalorder %v480, %v858
      %vm864 = vcmp.eq.s32.totalorder %v481, %v858
      %vm865 = vcmp.eq.s32.totalorder %v482, %v858
      %vm866 = vcmp.eq.s32.totalorder %v483, %v858
      %v867 = vsel %vm859, 1, 0
      %v868 = vsel %vm860, 1, 0
      %v869 = vsel %vm861, 1, 0
      %v870 = vsel %vm862, 1, 0
      %v871 = vsel %vm863, 1, 0
      %v872 = vsel %vm864, 1, 0
      %v873 = vsel %vm865, 1, 0
      %v874 = vsel %vm866, 1, 0
      %v875 = vcvt.s32.f32 %v867
      %v876 = vcvt.s32.f32 %v868
      %v877 = vcvt.s32.f32 %v869
      %v878 = vcvt.s32.f32 %v870
      %v879 = vcvt.s32.f32 %v871
      %v880 = vcvt.s32.f32 %v872
      %v881 = vcvt.s32.f32 %v873
      %v882 = vcvt.s32.f32 %v874
      %v884 = vsel %vm492, %v875, 0
      %v887 = vsel %vm492, %v876, 0
      %v890 = vsel %vm492, %v877, 0
      %v893 = vsel %vm492, %v878, 0
      %v896 = vsel %vm492, %v879, 0
      %v899 = vsel %vm492, %v880, 0
      %v902 = vsel %vm492, %v881, 0
      %v905 = vsel %vm492, %v882, 0
      %v908 = vsel %vm492, %v822, 0
      %v911 = vsel %vm492, %v825, 0
      %v914 = vsel %vm492, %v828, 0
      %v917 = vsel %vm492, %v831, 0
      %919 = vmatpush.xpose.msra.mxu0 0.0
      %920 = vmatpush.xpose.msra.mxu0 0.0
      %921 = vmatpush.xpose.msra.mxu0 0.0
      %922 = vmatpush.xpose.msra.mxu0 0.0
      %923 = vmatpush.xpose.msra.mxu0 0.0
      %924 = vmatpush.xpose.msra.mxu0 0.0
      %925 = vmatpush.xpose.msra.mxu0 0.0
      %926 = vmatpush.xpose.msra.mxu0 0.0
      %927 = vmatpush.xpose.msra.mxu0 0.0
      %928 = vmatpush.xpose.msra.mxu0 0.0
      %929 = vmatpush.xpose.msra.mxu0 0.0
      %930 = vmatpush.xpose.msra.mxu0 0.0
      %931 = vmatpush.xpose.msra.mxu0 %v917
      %932 = vmatpush.xpose.msra.mxu0 %v914
      %933 = vmatpush.xpose.msra.mxu0 %v911
      %934 = vmatpush.xpose.msra.mxu0 %v908
      %935 = vmatmul.f32.gmra.mxu0 %v884
      %v936 = vpop.f32.mrf.mxu0
      %v937 = vadd.f32 0.0, %v936
      %938 = vmatmul.f32.gmra.mxu0 %v887
      %v939 = vpop.f32.mrf.mxu0
      %v940 = vadd.f32 0.0, %v939
      %941 = vmatmul.f32.gmra.mxu0 %v890
      %v942 = vpop.f32.mrf.mxu0
      %v943 = vadd.f32 0.0, %v942
      %944 = vmatmul.f32.gmra.mxu0 %v893
      %v945 = vpop.f32.mrf.mxu0
      %v946 = vadd.f32 0.0, %v945
      %947 = vmatmul.f32.gmra.mxu0 %v896
      %v948 = vpop.f32.mrf.mxu0
      %v949 = vadd.f32 0.0, %v948
      %950 = vmatmul.f32.gmra.mxu0 %v899
      %v951 = vpop.f32.mrf.mxu0
      %v952 = vadd.f32 0.0, %v951
      %953 = vmatmul.f32.gmra.mxu0 %v902
      %v954 = vpop.f32.mrf.mxu0
      %v955 = vadd.f32 0.0, %v954
      %956 = vmatmul.f32.gmra.mxu0 %v905
      %v957 = vpop.f32.mrf.mxu0
      %v958 = vadd.f32 0.0, %v957
      %959 = vdwg.mxu0
      %v961 = vsel %vm492, %v850, 0
      %v964 = vsel %vm492, %v851, 0
      %v967 = vsel %vm492, %v852, 0
      %v970 = vsel %vm492, %v853, 0
      %v973 = vsel %vm492, %v854, 0
      %v976 = vsel %vm492, %v855, 0
      %v979 = vsel %vm492, %v856, 0
      %v982 = vsel %vm492, %v857, 0
      %v985 = vsel %vm492, %v810, 0
      %v988 = vsel %vm492, %v813, 0
      %v991 = vsel %vm492, %v816, 0
      %v994 = vsel %vm492, %v819, 0
      %996 = vmatpush.xpose.msra.mxu0 0.0
      %997 = vmatpush.xpose.msra.mxu0 0.0
      %998 = vmatpush.xpose.msra.mxu0 0.0
      %999 = vmatpush.xpose.msra.mxu0 0.0
      %1000 = vmatpush.xpose.msra.mxu0 0.0
      %1001 = vmatpush.xpose.msra.mxu0 0.0
      %1002 = vmatpush.xpose.msra.mxu0 0.0
      %1003 = vmatpush.xpose.msra.mxu0 0.0
      %1004 = vmatpush.xpose.msra.mxu0 0.0
      %1005 = vmatpush.xpose.msra.mxu0 0.0
      %1006 = vmatpush.xpose.msra.mxu0 0.0
      %1007 = vmatpush.xpose.msra.mxu0 0.0
      %1008 = vmatpush.xpose.msra.mxu0 %v994
      %1009 = vmatpush.xpose.msra.mxu0 %v991
      %1010 = vmatpush.xpose.msra.mxu0 %v988
      %1011 = vmatpush.xpose.msra.mxu0 %v985
      %1012 = vmatmul.f32.gmra.mxu0 %v961
      %v1013 = vpop.f32.mrf.mxu0
      %v1014 = vadd.f32 %v937, %v1013
      %1015 = vmatmul.f32.gmra.mxu0 %v964
      %v1016 = vpop.f32.mrf.mxu0
      %v1017 = vadd.f32 %v940, %v1016
      %1018 = vmatmul.f32.gmra.mxu0 %v967
      %v1019 = vpop.f32.mrf.mxu0
      %v1020 = vadd.f32 %v943, %v1019
      %1021 = vmatmul.f32.gmra.mxu0 %v970
      %v1022 = vpop.f32.mrf.mxu0
      %v1023 = vadd.f32 %v946, %v1022
      %1024 = vmatmul.f32.gmra.mxu0 %v973
      %v1025 = vpop.f32.mrf.mxu0
      %v1026 = vadd.f32 %v949, %v1025
      %1027 = vmatmul.f32.gmra.mxu0 %v976
      %v1028 = vpop.f32.mrf.mxu0
      %v1029 = vadd.f32 %v952, %v1028
      %1030 = vmatmul.f32.gmra.mxu0 %v979
      %v1031 = vpop.f32.mrf.mxu0
      %v1032 = vadd.f32 %v955, %v1031
      %1033 = vmatmul.f32.gmra.mxu0 %v982
      %v1034 = vpop.f32.mrf.mxu0
      %v1035 = vadd.f32 %v958, %v1034
      %1036 = vdwg.mxu0
      %1037 = vrot.lane.b32.xlu0 %v467, 96
      %v1038 = vpop.permute.xlu0 %1037
      %1039 = vrot.lane.b32.xlu0 %v468, 96
      %v1040 = vpop.permute.xlu0 %1039
      %1041 = vrot.lane.b32.xlu0 %v469, 96
      %v1042 = vpop.permute.xlu0 %1041
      %1043 = vrot.lane.b32.xlu0 %v470, 96
      %v1044 = vpop.permute.xlu0 %1043
      %1045 = vrot.lane.b32.xlu0 %v471, 96
      %v1046 = vpop.permute.xlu0 %1045
      %1047 = vrot.lane.b32.xlu0 %v472, 96
      %v1048 = vpop.permute.xlu0 %1047
      %1049 = vrot.lane.b32.xlu0 %v473, 96
      %v1050 = vpop.permute.xlu0 %1049
      %1051 = vrot.lane.b32.xlu0 %v474, 96
      %v1052 = vpop.permute.xlu0 %1051
      %v1053 = vsel %vm492, %v1038, 0
      %v1055 = vsel %vm492, %v1040, 0
      %v1057 = vsel %vm492, %v1042, 0
      %v1059 = vsel %vm492, %v1044, 0
      %v1061 = vsel %vm492, %v1046, 0
      %v1063 = vsel %vm492, %v1048, 0
      %v1065 = vsel %vm492, %v1050, 0
      %v1067 = vsel %vm492, %v1052, 0
      %1069 = vmatpush.msra.mxu0 0.0
      %1070 = vmatpush.msra.mxu0 0.0
      %1071 = vmatpush.msra.mxu0 0.0
      %1072 = vmatpush.msra.mxu0 0.0
      %1073 = vmatpush.msra.mxu0 0.0
      %1074 = vmatpush.msra.mxu0 0.0
      %1075 = vmatpush.msra.mxu0 0.0
      %1076 = vmatpush.msra.mxu0 0.0
      %1077 = vmatpush.msra.mxu0 0.0
      %1078 = vmatpush.msra.mxu0 0.0
      %1079 = vmatpush.msra.mxu0 0.0
      %1080 = vmatpush.msra.mxu0 0.0
      %1081 = vmatpush.msra.mxu0 %v489
      %1082 = vmatpush.msra.mxu0 %v488
      %1083 = vmatpush.msra.mxu0 %v487
      %1084 = vmatpush.msra.mxu0 %v486
      %1085 = vmatmul.f32.gmra.mxu0 %v1053
      %v1086 = vpop.f32.mrf.mxu0
      %v1087 = vadd.f32 %v491, %v1086
      %1088 = vmatmul.f32.gmra.mxu0 %v1055
      %v1089 = vpop.f32.mrf.mxu0
      %v1090 = vadd.f32 %v491, %v1089
      %1091 = vmatmul.f32.gmra.mxu0 %v1057
      %v1092 = vpop.f32.mrf.mxu0
      %v1093 = vadd.f32 %v491, %v1092
      %1094 = vmatmul.f32.gmra.mxu0 %v1059
      %v1095 = vpop.f32.mrf.mxu0
      %v1096 = vadd.f32 %v491, %v1095
      %1097 = vmatmul.f32.gmra.mxu0 %v1061
      %v1098 = vpop.f32.mrf.mxu0
      %v1099 = vadd.f32 %v491, %v1098
      %1100 = vmatmul.f32.gmra.mxu0 %v1063
      %v1101 = vpop.f32.mrf.mxu0
      %v1102 = vadd.f32 %v491, %v1101
      %1103 = vmatmul.f32.gmra.mxu0 %v1065
      %v1104 = vpop.f32.mrf.mxu0
      %v1105 = vadd.f32 %v491, %v1104
      %1106 = vmatmul.f32.gmra.mxu0 %v1067
      %v1107 = vpop.f32.mrf.mxu0
      %v1108 = vadd.f32 %v491, %v1107
      %1109 = vdwg.mxu0
      %1118 = vrot.lane.b32.xlu0 %v1087, 120
      %v1119 = vpop.permute.xlu0 %1118
      %1120 = vrot.lane.b32.xlu0 %v1090, 120
      %v1121 = vpop.permute.xlu0 %1120
      %1122 = vrot.lane.b32.xlu0 %v1093, 120
      %v1123 = vpop.permute.xlu0 %1122
      %1124 = vrot.lane.b32.xlu0 %v1096, 120
      %v1125 = vpop.permute.xlu0 %1124
      %1126 = vrot.lane.b32.xlu0 %v1099, 120
      %v1127 = vpop.permute.xlu0 %1126
      %1128 = vrot.lane.b32.xlu0 %v1102, 120
      %v1129 = vpop.permute.xlu0 %1128
      %1130 = vrot.lane.b32.xlu0 %v1105, 120
      %v1131 = vpop.permute.xlu0 %1130
      %1132 = vrot.lane.b32.xlu0 %v1108, 120
      %v1133 = vpop.permute.xlu0 %1132
      %v1134 = vsel %vm582, %v1087, 0
      %v1136 = vsel %vm582, %v1090, 0
      %v1138 = vsel %vm582, %v1093, 0
      %v1140 = vsel %vm582, %v1096, 0
      %v1142 = vsel %vm582, %v1099, 0
      %v1144 = vsel %vm582, %v1102, 0
      %v1146 = vsel %vm582, %v1105, 0
      %v1148 = vsel %vm582, %v1108, 0
      %v1150 = vsel %vm582, %v1119, 0
      %v1152 = vsel %vm582, %v1121, 0
      %v1154 = vsel %vm582, %v1123, 0
      %v1156 = vsel %vm582, %v1125, 0
      %v1158 = vsel %vm582, %v1127, 0
      %v1160 = vsel %vm582, %v1129, 0
      %v1162 = vsel %vm582, %v1131, 0
      %v1164 = vsel %vm582, %v1133, 0
      %1166 = vmatpush.xpose.msra.mxu0 0.0
      %1167 = vmatpush.xpose.msra.mxu0 0.0
      %1168 = vmatpush.xpose.msra.mxu0 0.0
      %1169 = vmatpush.xpose.msra.mxu0 0.0
      %1170 = vmatpush.xpose.msra.mxu0 0.0
      %1171 = vmatpush.xpose.msra.mxu0 0.0
      %1172 = vmatpush.xpose.msra.mxu0 0.0
      %1173 = vmatpush.xpose.msra.mxu0 0.0
      %1174 = vmatpush.xpose.msra.mxu0 %v1164
      %1175 = vmatpush.xpose.msra.mxu0 %v1162
      %1176 = vmatpush.xpose.msra.mxu0 %v1160
      %1177 = vmatpush.xpose.msra.mxu0 %v1158
      %1178 = vmatpush.xpose.msra.mxu0 %v1156
      %1179 = vmatpush.xpose.msra.mxu0 %v1154
      %1180 = vmatpush.xpose.msra.mxu0 %v1152
      %1181 = vmatpush.xpose.msra.mxu0 %v1150
      %1182 = vmatmul.f32.gmra.mxu0 %v1134
      %v1183 = vpop.f32.mrf.mxu0
      %v1184 = vadd.f32 0.0, %v1183
      %1185 = vmatmul.f32.gmra.mxu0 %v1136
      %v1186 = vpop.f32.mrf.mxu0
      %v1187 = vadd.f32 0.0, %v1186
      %1188 = vmatmul.f32.gmra.mxu0 %v1138
      %v1189 = vpop.f32.mrf.mxu0
      %v1190 = vadd.f32 0.0, %v1189
      %1191 = vmatmul.f32.gmra.mxu0 %v1140
      %v1192 = vpop.f32.mrf.mxu0
      %v1193 = vadd.f32 0.0, %v1192
      %1194 = vmatmul.f32.gmra.mxu0 %v1142
      %v1195 = vpop.f32.mrf.mxu0
      %v1196 = vadd.f32 0.0, %v1195
      %1197 = vmatmul.f32.gmra.mxu0 %v1144
      %v1198 = vpop.f32.mrf.mxu0
      %v1199 = vadd.f32 0.0, %v1198
      %1200 = vmatmul.f32.gmra.mxu0 %v1146
      %v1201 = vpop.f32.mrf.mxu0
      %v1202 = vadd.f32 0.0, %v1201
      %1203 = vmatmul.f32.gmra.mxu0 %v1148
      %v1204 = vpop.f32.mrf.mxu0
      %v1205 = vadd.f32 0.0, %v1204
      %1206 = vdwg.mxu0
      %v1207 = vsel %vm318, %v1184, -inf
      %1208 = vmax.xlane.f32.xlu0 %v1207
      %v1209 = vpop.xlane.xlu0 %1208
      %v1210 = vsel %vm318, %v1187, -inf
      %1211 = vmax.xlane.f32.xlu0 %v1210
      %v1212 = vpop.xlane.xlu0 %1211
      %v1213 = vsel %vm318, %v1190, -inf
      %1214 = vmax.xlane.f32.xlu0 %v1213
      %v1215 = vpop.xlane.xlu0 %1214
      %v1216 = vsel %vm318, %v1193, -inf
      %1217 = vmax.xlane.f32.xlu0 %v1216
      %v1218 = vpop.xlane.xlu0 %1217
      %v1219 = vsel %vm318, %v1196, -inf
      %1220 = vmax.xlane.f32.xlu0 %v1219
      %v1221 = vpop.xlane.xlu0 %1220
      %v1222 = vsel %vm318, %v1199, -inf
      %1223 = vmax.xlane.f32.xlu0 %v1222
      %v1224 = vpop.xlane.xlu0 %1223
      %v1225 = vsel %vm318, %v1202, -inf
      %1226 = vmax.xlane.f32.xlu0 %v1225
      %v1227 = vpop.xlane.xlu0 %1226
      %v1228 = vsel %vm318, %v1205, -inf
      %1229 = vmax.xlane.f32.xlu0 %v1228
      %v1230 = vpop.xlane.xlu0 %1229
      %v1231 = vsub.f32 %v1184, %v1209
      %v1232 = vsub.f32 %v1187, %v1212
      %v1233 = vsub.f32 %v1190, %v1215
      %v1234 = vsub.f32 %v1193, %v1218
      %v1235 = vsub.f32 %v1196, %v1221
      %v1236 = vsub.f32 %v1199, %v1224
      %v1237 = vsub.f32 %v1202, %v1227
      %v1238 = vsub.f32 %v1205, %v1230
      %v1239 = vmul.f32 %v1231, 1.442695
      %v1240 = vpow.pop %v1239
      %v1241 = vmul.f32 %v1232, 1.442695
      %v1242 = vpow.pop %v1241
      %v1243 = vmul.f32 %v1233, 1.442695
      %v1244 = vpow.pop %v1243
      %v1245 = vmul.f32 %v1234, 1.442695
      %v1246 = vpow.pop %v1245
      %v1247 = vmul.f32 %v1235, 1.442695
      %v1248 = vpow.pop %v1247
      %v1249 = vmul.f32 %v1236, 1.442695
      %v1250 = vpow.pop %v1249
      %v1251 = vmul.f32 %v1237, 1.442695
      %v1252 = vpow.pop %v1251
      %v1253 = vmul.f32 %v1238, 1.442695
      %v1254 = vpow.pop %v1253
      %v1255 = vsel %vm318, %v1240, 0.0
      %1256 = vadd.xlane.f32.xlu0 %v1255
      %v1257 = vpop.xlane.xlu0 %1256
      %v1258 = vsel %vm318, %v1242, 0.0
      %1259 = vadd.xlane.f32.xlu0 %v1258
      %v1260 = vpop.xlane.xlu0 %1259
      %v1261 = vsel %vm318, %v1244, 0.0
      %1262 = vadd.xlane.f32.xlu0 %v1261
      %v1263 = vpop.xlane.xlu0 %1262
      %v1264 = vsel %vm318, %v1246, 0.0
      %1265 = vadd.xlane.f32.xlu0 %v1264
      %v1266 = vpop.xlane.xlu0 %1265
      %v1267 = vsel %vm318, %v1248, 0.0
      %1268 = vadd.xlane.f32.xlu0 %v1267
      %v1269 = vpop.xlane.xlu0 %1268
      %v1270 = vsel %vm318, %v1250, 0.0
      %1271 = vadd.xlane.f32.xlu0 %v1270
      %v1272 = vpop.xlane.xlu0 %1271
      %v1273 = vsel %vm318, %v1252, 0.0
      %1274 = vadd.xlane.f32.xlu0 %v1273
      %v1275 = vpop.xlane.xlu0 %1274
      %v1276 = vsel %vm318, %v1254, 0.0
      %1277 = vadd.xlane.f32.xlu0 %v1276
      %v1278 = vpop.xlane.xlu0 %1277
      %v1279 = vrcp.pop %v1257
      %v1280 = vrcp.pop %v1260
      %v1281 = vrcp.pop %v1263
      %v1282 = vrcp.pop %v1266
      %v1283 = vrcp.pop %v1269
      %v1284 = vrcp.pop %v1272
      %v1285 = vrcp.pop %v1275
      %v1286 = vrcp.pop %v1278
      %v1287 = vmul.f32 %v1240, %v1279
      %v1288 = vmul.f32 %v1242, %v1280
      %v1289 = vmul.f32 %v1244, %v1281
      %v1290 = vmul.f32 %v1246, %v1282
      %v1291 = vmul.f32 %v1248, %v1283
      %v1292 = vmul.f32 %v1250, %v1284
      %v1293 = vmul.f32 %v1252, %v1285
      %v1294 = vmul.f32 %v1254, %v1286
      %1295 = vrot.lane.b32.xlu0 %v1087, 112
      %v1296 = vpop.permute.xlu0 %1295
      %1297 = vrot.lane.b32.xlu0 %v1090, 112
      %v1298 = vpop.permute.xlu0 %1297
      %1299 = vrot.lane.b32.xlu0 %v1093, 112
      %v1300 = vpop.permute.xlu0 %1299
      %1301 = vrot.lane.b32.xlu0 %v1096, 112
      %v1302 = vpop.permute.xlu0 %1301
      %1303 = vrot.lane.b32.xlu0 %v1099, 112
      %v1304 = vpop.permute.xlu0 %1303
      %1305 = vrot.lane.b32.xlu0 %v1102, 112
      %v1306 = vpop.permute.xlu0 %1305
      %1307 = vrot.lane.b32.xlu0 %v1105, 112
      %v1308 = vpop.permute.xlu0 %1307
      %1309 = vrot.lane.b32.xlu0 %v1108, 112
      %v1310 = vpop.permute.xlu0 %1309
      %v1320 = vsel %vm318, %v1287, 0
      %v1323 = vsel %vm318, %v1288, 0
      %v1326 = vsel %vm318, %v1289, 0
      %v1329 = vsel %vm318, %v1290, 0
      %v1332 = vsel %vm318, %v1291, 0
      %v1335 = vsel %vm318, %v1292, 0
      %v1338 = vsel %vm318, %v1293, 0
      %v1341 = vsel %vm318, %v1294, 0
      %1343 = vmatpush.msra.mxu0 0.0
      %1344 = vmatpush.msra.mxu0 0.0
      %1345 = vmatpush.msra.mxu0 0.0
      %1346 = vmatpush.msra.mxu0 0.0
      %1347 = vmatpush.msra.mxu0 0.0
      %1348 = vmatpush.msra.mxu0 0.0
      %1349 = vmatpush.msra.mxu0 0.0
      %1350 = vmatpush.msra.mxu0 0.0
      %1351 = vmatpush.msra.mxu0 %v1310
      %1352 = vmatpush.msra.mxu0 %v1308
      %1353 = vmatpush.msra.mxu0 %v1306
      %1354 = vmatpush.msra.mxu0 %v1304
      %1355 = vmatpush.msra.mxu0 %v1302
      %1356 = vmatpush.msra.mxu0 %v1300
      %1357 = vmatpush.msra.mxu0 %v1298
      %1358 = vmatpush.msra.mxu0 %v1296
      %1359 = vmatmul.f32.gmra.mxu0 %v1320
      %v1360 = vpop.f32.mrf.mxu0
      %v1361 = vadd.f32 0.0, %v1360
      %1362 = vmatmul.f32.gmra.mxu0 %v1323
      %v1363 = vpop.f32.mrf.mxu0
      %v1364 = vadd.f32 0.0, %v1363
      %1365 = vmatmul.f32.gmra.mxu0 %v1326
      %v1366 = vpop.f32.mrf.mxu0
      %v1367 = vadd.f32 0.0, %v1366
      %1368 = vmatmul.f32.gmra.mxu0 %v1329
      %v1369 = vpop.f32.mrf.mxu0
      %v1370 = vadd.f32 0.0, %v1369
      %1371 = vmatmul.f32.gmra.mxu0 %v1332
      %v1372 = vpop.f32.mrf.mxu0
      %v1373 = vadd.f32 0.0, %v1372
      %1374 = vmatmul.f32.gmra.mxu0 %v1335
      %v1375 = vpop.f32.mrf.mxu0
      %v1376 = vadd.f32 0.0, %v1375
      %1377 = vmatmul.f32.gmra.mxu0 %v1338
      %v1378 = vpop.f32.mrf.mxu0
      %v1379 = vadd.f32 0.0, %v1378
      %1380 = vmatmul.f32.gmra.mxu0 %v1341
      %v1381 = vpop.f32.mrf.mxu0
      %v1382 = vadd.f32 0.0, %v1381
      %1383 = vdwg.mxu0
      %v1385 = vsel %vm492, %v1373, 0
      %v1388 = vsel %vm492, %v1376, 0
      %v1391 = vsel %vm492, %v1379, 0
      %v1394 = vsel %vm492, %v1382, 0
      %1396 = vmatpush.xpose.msra.mxu0 0.0
      %1397 = vmatpush.xpose.msra.mxu0 0.0
      %1398 = vmatpush.xpose.msra.mxu0 0.0
      %1399 = vmatpush.xpose.msra.mxu0 0.0
      %1400 = vmatpush.xpose.msra.mxu0 0.0
      %1401 = vmatpush.xpose.msra.mxu0 0.0
      %1402 = vmatpush.xpose.msra.mxu0 0.0
      %1403 = vmatpush.xpose.msra.mxu0 0.0
      %1404 = vmatpush.xpose.msra.mxu0 0.0
      %1405 = vmatpush.xpose.msra.mxu0 0.0
      %1406 = vmatpush.xpose.msra.mxu0 0.0
      %1407 = vmatpush.xpose.msra.mxu0 0.0
      %1408 = vmatpush.xpose.msra.mxu0 %v1394
      %1409 = vmatpush.xpose.msra.mxu0 %v1391
      %1410 = vmatpush.xpose.msra.mxu0 %v1388
      %1411 = vmatpush.xpose.msra.mxu0 %v1385
      %1412 = vmatmul.f32.gmra.mxu0 %v884
      %v1413 = vpop.f32.mrf.mxu0
      %v1414 = vadd.f32 0.0, %v1413
      %1415 = vmatmul.f32.gmra.mxu0 %v887
      %v1416 = vpop.f32.mrf.mxu0
      %v1417 = vadd.f32 0.0, %v1416
      %1418 = vmatmul.f32.gmra.mxu0 %v890
      %v1419 = vpop.f32.mrf.mxu0
      %v1420 = vadd.f32 0.0, %v1419
      %1421 = vmatmul.f32.gmra.mxu0 %v893
      %v1422 = vpop.f32.mrf.mxu0
      %v1423 = vadd.f32 0.0, %v1422
      %1424 = vmatmul.f32.gmra.mxu0 %v896
      %v1425 = vpop.f32.mrf.mxu0
      %v1426 = vadd.f32 0.0, %v1425
      %1427 = vmatmul.f32.gmra.mxu0 %v899
      %v1428 = vpop.f32.mrf.mxu0
      %v1429 = vadd.f32 0.0, %v1428
      %1430 = vmatmul.f32.gmra.mxu0 %v902
      %v1431 = vpop.f32.mrf.mxu0
      %v1432 = vadd.f32 0.0, %v1431
      %1433 = vmatmul.f32.gmra.mxu0 %v905
      %v1434 = vpop.f32.mrf.mxu0
      %v1435 = vadd.f32 0.0, %v1434
      %1436 = vdwg.mxu0
      %v1438 = vsel %vm492, %v1361, 0
      %v1441 = vsel %vm492, %v1364, 0
      %v1444 = vsel %vm492, %v1367, 0
      %v1447 = vsel %vm492, %v1370, 0
      %1449 = vmatpush.xpose.msra.mxu0 0.0
      %1450 = vmatpush.xpose.msra.mxu0 0.0
      %1451 = vmatpush.xpose.msra.mxu0 0.0
      %1452 = vmatpush.xpose.msra.mxu0 0.0
      %1453 = vmatpush.xpose.msra.mxu0 0.0
      %1454 = vmatpush.xpose.msra.mxu0 0.0
      %1455 = vmatpush.xpose.msra.mxu0 0.0
      %1456 = vmatpush.xpose.msra.mxu0 0.0
      %1457 = vmatpush.xpose.msra.mxu0 0.0
      %1458 = vmatpush.xpose.msra.mxu0 0.0
      %1459 = vmatpush.xpose.msra.mxu0 0.0
      %1460 = vmatpush.xpose.msra.mxu0 0.0
      %1461 = vmatpush.xpose.msra.mxu0 %v1447
      %1462 = vmatpush.xpose.msra.mxu0 %v1444
      %1463 = vmatpush.xpose.msra.mxu0 %v1441
      %1464 = vmatpush.xpose.msra.mxu0 %v1438
      %1465 = vmatmul.f32.gmra.mxu0 %v961
      %v1466 = vpop.f32.mrf.mxu0
      %v1467 = vadd.f32 %v1414, %v1466
      %1468 = vmatmul.f32.gmra.mxu0 %v964
      %v1469 = vpop.f32.mrf.mxu0
      %v1470 = vadd.f32 %v1417, %v1469
      %1471 = vmatmul.f32.gmra.mxu0 %v967
      %v1472 = vpop.f32.mrf.mxu0
      %v1473 = vadd.f32 %v1420, %v1472
      %1474 = vmatmul.f32.gmra.mxu0 %v970
      %v1475 = vpop.f32.mrf.mxu0
      %v1476 = vadd.f32 %v1423, %v1475
      %1477 = vmatmul.f32.gmra.mxu0 %v973
      %v1478 = vpop.f32.mrf.mxu0
      %v1479 = vadd.f32 %v1426, %v1478
      %1480 = vmatmul.f32.gmra.mxu0 %v976
      %v1481 = vpop.f32.mrf.mxu0
      %v1482 = vadd.f32 %v1429, %v1481
      %1483 = vmatmul.f32.gmra.mxu0 %v979
      %v1484 = vpop.f32.mrf.mxu0
      %v1485 = vadd.f32 %v1432, %v1484
      %1486 = vmatmul.f32.gmra.mxu0 %v982
      %v1487 = vpop.f32.mrf.mxu0
      %v1488 = vadd.f32 %v1435, %v1487
      %1489 = vdwg.mxu0
      %s1491 = vtos %v230
      %v1492 = vstv %s1491
      %v1494 = vmul.f32 %v1492, %v1014
      %v1495 = vmul.f32 %v1492, %v1017
      %v1496 = vmul.f32 %v1492, %v1020
      %v1497 = vmul.f32 %v1492, %v1023
      %v1498 = vmul.f32 %v1492, %v1026
      %v1499 = vmul.f32 %v1492, %v1029
      %v1500 = vmul.f32 %v1492, %v1032
      %v1501 = vmul.f32 %v1492, %v1035
      %v1502 = vadd.f32 %v1494, %v467
      %v1503 = vadd.f32 %v1495, %v468
      %v1504 = vadd.f32 %v1496, %v469
      %v1505 = vadd.f32 %v1497, %v470
      %v1506 = vadd.f32 %v1498, %v471
      %v1507 = vadd.f32 %v1499, %v472
      %v1508 = vadd.f32 %v1500, %v473
      %v1509 = vadd.f32 %v1501, %v474
      %v1510 = vsel %vm492, %v1502, 0.0
      %v1511 = vsel %vm492, %v1503, 0.0
      %v1512 = vadd.f32 %v1510, %v1511
      %v1513 = vsel %vm492, %v1504, 0.0
      %v1514 = vadd.f32 %v1512, %v1513
      %v1515 = vsel %vm492, %v1505, 0.0
      %v1516 = vadd.f32 %v1514, %v1515
      %v1517 = vsel %vm492, %v1506, 0.0
      %v1518 = vadd.f32 %v1516, %v1517
      %v1519 = vsel %vm492, %v1507, 0.0
      %v1520 = vadd.f32 %v1518, %v1519
      %v1521 = vsel %vm492, %v1508, 0.0
      %v1522 = vadd.f32 %v1520, %v1521
      %v1523 = vsel %vm492, %v1509, 0.0
      %v1524 = vadd.f32 %v1522, %v1523
      %v1525 = vrot.slane %v1524, 4
      %v1526 = vadd.f32 %v1524, %v1525
      %v1527 = vrot.slane %v1526, 2
      %v1528 = vadd.f32 %v1526, %v1527
      %v1529 = vrot.slane %v1528, 1
      %v1530 = vadd.f32 %v1528, %v1529
      %v1531 = vrcp.pop 64.0
      %v1532 = vmul.f32 64.0, %v1531
      %v1533 = vsub.f32 1.0, %v1532
      %v1534 = vmul.f32 %v1531, %v1533
      %v1535 = vadd.f32 %v1531, %v1534
      %vm1536 = vweird.f32 %v1531
      %v1537 = vsel %vm1536, %v1531, %v1535
      %v1538 = vmul.f32 %v1530, %v1537
      %v1539 = vld [vmem:[%s2 + $0x120] sm:$0xff]
      %v1540 = vld [vmem:[%s2 + $0x128] sm:$0xff]
      %v1541 = vld [vmem:[%s2 + $0x130] sm:$0xff]
      %v1542 = vld [vmem:[%s2 + $0x138] sm:$0xff]
      %v1543 = vld [vmem:[%s2 + $0x140] sm:$0x1]
      %v1545 = vsel %vm492, %v1538, 0
      %1547 = vmatpush.msra.mxu0 0.0
      %1548 = vmatpush.msra.mxu0 0.0
      %1549 = vmatpush.msra.mxu0 0.0
      %1550 = vmatpush.msra.mxu0 0.0
      %1551 = vmatpush.msra.mxu0 0.0
      %1552 = vmatpush.msra.mxu0 0.0
      %1553 = vmatpush.msra.mxu0 0.0
      %1554 = vmatpush.msra.mxu0 0.0
      %1555 = vmatpush.msra.mxu0 0.0
      %1556 = vmatpush.msra.mxu0 0.0
      %1557 = vmatpush.msra.mxu0 0.0
      %1558 = vmatpush.msra.mxu0 0.0
      %1559 = vmatpush.msra.mxu0 %v1542
      %1560 = vmatpush.msra.mxu0 %v1541
      %1561 = vmatpush.msra.mxu0 %v1540
      %1562 = vmatpush.msra.mxu0 %v1539
      %1563 = vmatmul.f32.gmra.mxu0 %v1545
      %v1564 = vpop.f32.mrf.mxu0
      %v1565 = vadd.f32 %v1543, %v1564
      %1566 = vdwg.mxu0
      %v1567 = vmax.f32 %v1565, 0.0
      %v1568 = vld [vmem:[%s2 + $0x148] sm:$0xff]
      %v1569 = vld [vmem:[%s2 + $0x150] sm:$0xff]
      %v1570 = vld [vmem:[%s2 + $0x158] sm:$0xff]
      %v1571 = vld [vmem:[%s2 + $0x160] sm:$0xff]
      %v1572 = vld [vmem:[%s2 + $0x168] sm:$0x1]
      %v1574 = vsel %vm492, %v1567, 0
      %1576 = vmatpush.msra.mxu0 0.0
      %1577 = vmatpush.msra.mxu0 0.0
      %1578 = vmatpush.msra.mxu0 0.0
      %1579 = vmatpush.msra.mxu0 0.0
      %1580 = vmatpush.msra.mxu0 0.0
      %1581 = vmatpush.msra.mxu0 0.0
      %1582 = vmatpush.msra.mxu0 0.0
      %1583 = vmatpush.msra.mxu0 0.0
      %1584 = vmatpush.msra.mxu0 0.0
      %1585 = vmatpush.msra.mxu0 0.0
      %1586 = vmatpush.msra.mxu0 0.0
      %1587 = vmatpush.msra.mxu0 0.0
      %1588 = vmatpush.msra.mxu0 %v1571
      %1589 = vmatpush.msra.mxu0 %v1570
      %1590 = vmatpush.msra.mxu0 %v1569
      %1591 = vmatpush.msra.mxu0 %v1568
      %1592 = vmatmul.f32.gmra.mxu0 %v1574
      %v1593 = vpop.f32.mrf.mxu0
      %v1594 = vadd.f32 %v1572, %v1593
      %1595 = vdwg.mxu0
      %v1596 = vsub.f32 0.0, %v1594
      %v1597 = vmul.f32 %v1596, 1.442695
      %v1598 = vpow.pop %v1597
      %v1599 = vadd.f32 %v1598, 1.0
      %v1600 = vrcp.pop %v1599
      %v1601 = vmul.f32 %v1599, %v1600
      %v1602 = vsub.f32 1.0, %v1601
      %v1603 = vmul.f32 %v1600, %v1602
      %v1604 = vadd.f32 %v1600, %v1603
      %vm1605 = vweird.f32 %v1599
      %vm1606 = vweird.f32 %v1600
      %vm1607 = vmor %vm1605, %vm1606
      %v1608 = vsel %vm1607, %v1600, %v1604
      %v1609 = vand.u32 2147483647, %v1599
      %vm1610 = vcmp.eq.f32.partialorder %v1609, 8.507059e+37
      %v1611 = vand.u32 %v1599, 2147483648
      %v1612 = vor.u32 1.1754944e-38, %v1611
      %v1613 = vsel %vm1610, %v1612, %v1608
      %v1614 = vmul.f32 0.9, %v1613
      %v1615 = vadd.f32 %v1614, 0.1
      %v1616 = vmul.f32 %v1615, 0.1
      %vm1617 = vcmask 122880
      %1618 = vst.msk [vmem:[%s220] sm:$0x1] %vm1617, %v1594
      %vm1619 = vcmask 254080
      %1620 = vst.msk [vmem:[%s220] sm:$0x1] %vm1619, %v1616
      %v1621 = vmul.f32 %v1492, %v1467
      %v1622 = vmul.f32 %v1492, %v1470
      %v1623 = vmul.f32 %v1492, %v1473
      %v1624 = vmul.f32 %v1492, %v1476
      %v1625 = vmul.f32 %v1492, %v1479
      %v1626 = vmul.f32 %v1492, %v1482
      %v1627 = vmul.f32 %v1492, %v1485
      %v1628 = vmul.f32 %v1492, %v1488
      %v1637 = vadd.f32 %v1621, %v1038
      %v1638 = vadd.f32 %v1622, %v1040
      %v1639 = vadd.f32 %v1623, %v1042
      %v1640 = vadd.f32 %v1624, %v1044
      %v1641 = vadd.f32 %v1625, %v1046
      %v1642 = vadd.f32 %v1626, %v1048
      %v1643 = vadd.f32 %v1627, %v1050
      %v1644 = vadd.f32 %v1628, %v1052
      %v1645 = vld [vmem:[%s2 + $0xc8] sm:$0xff]
      %v1646 = vld [vmem:[%s2 + $0xd0] sm:$0x1]
      %v1647 = vperm.slane %v1646, 0
      %1648 = vmatpush.msra.mxu0 0.0
      %1649 = vmatpush.msra.mxu0 0.0
      %1650 = vmatpush.msra.mxu0 0.0
      %1651 = vmatpush.msra.mxu0 0.0
      %1652 = vmatpush.msra.mxu0 0.0
      %1653 = vmatpush.msra.mxu0 0.0
      %1654 = vmatpush.msra.mxu0 0.0
      %1655 = vmatpush.msra.mxu0 0.0
      %1656 = vmatpush.msra.mxu0 0.0
      %1657 = vmatpush.msra.mxu0 0.0
      %1658 = vmatpush.msra.mxu0 0.0
      %1659 = vmatpush.msra.mxu0 0.0
      %1660 = vmatpush.msra.mxu0 0.0
      %1661 = vmatpush.msra.mxu0 0.0
      %1662 = vmatpush.msra.mxu0 0.0
      %1663 = vmatpush.msra.mxu0 %v1645
      %1664 = vmatmul.f32.gmra.mxu0 %v236
      %v1665 = vpop.f32.mrf.mxu0
      %v1666 = vadd.f32 %v1647, %v1665
      %1667 = vmatmul.f32.gmra.mxu0 %v239
      %v1668 = vpop.f32.mrf.mxu0
      %v1669 = vadd.f32 %v1647, %v1668
      %1670 = vmatmul.f32.gmra.mxu0 %v242
      %v1671 = vpop.f32.mrf.mxu0
      %v1672 = vadd.f32 %v1647, %v1671
      %1673 = vmatmul.f32.gmra.mxu0 %v245
      %v1674 = vpop.f32.mrf.mxu0
      %v1675 = vadd.f32 %v1647, %v1674
      %1676 = vmatmul.f32.gmra.mxu0 %v248
      %v1677 = vpop.f32.mrf.mxu0
      %v1678 = vadd.f32 %v1647, %v1677
      %1679 = vmatmul.f32.gmra.mxu0 %v251
      %v1680 = vpop.f32.mrf.mxu0
      %v1681 = vadd.f32 %v1647, %v1680
      %1682 = vmatmul.f32.gmra.mxu0 %v254
      %v1683 = vpop.f32.mrf.mxu0
      %v1684 = vadd.f32 %v1647, %v1683
      %1685 = vmatmul.f32.gmra.mxu0 %v257
      %v1686 = vpop.f32.mrf.mxu0
      %v1687 = vadd.f32 %v1647, %v1686
      %1688 = vdwg.mxu0
      %v1689 = vmax.f32 %v1666, 0.0
      %v1690 = vmax.f32 %v1669, 0.0
      %v1691 = vmax.f32 %v1672, 0.0
      %v1692 = vmax.f32 %v1675, 0.0
      %v1693 = vmax.f32 %v1678, 0.0
      %v1694 = vmax.f32 %v1681, 0.0
      %v1695 = vmax.f32 %v1684, 0.0
      %v1696 = vmax.f32 %v1687, 0.0
      %v1697 = vld [vmem:[%s2 + $0xd8] sm:$0xff]
      %v1698 = vld [vmem:[%s2 + $0xe0] sm:$0xff]
      %v1699 = vld [vmem:[%s2 + $0xe8] sm:$0xff]
      %v1700 = vld [vmem:[%s2 + $0xf0] sm:$0xff]
      %v1701 = vld [vmem:[%s2 + $0xf8] sm:$0xff]
      %v1702 = vld [vmem:[%s2 + $0x100] sm:$0xff]
      %v1703 = vld [vmem:[%s2 + $0x108] sm:$0xff]
      %v1704 = vld [vmem:[%s2 + $0x110] sm:$0xff]
      %v1705 = vld [vmem:[%s2 + $0x118] sm:$0x1]
      %v1706 = vperm.slane %v1705, 0
      %v1708 = vsel %vm318, %v1689, 0
      %v1711 = vsel %vm318, %v1690, 0
      %v1714 = vsel %vm318, %v1691, 0
      %v1717 = vsel %vm318, %v1692, 0
      %v1720 = vsel %vm318, %v1693, 0
      %v1723 = vsel %vm318, %v1694, 0
      %v1726 = vsel %vm318, %v1695, 0
      %v1729 = vsel %vm318, %v1696, 0
      %1731 = vmatpush.msra.mxu0 0.0
      %1732 = vmatpush.msra.mxu0 0.0
      %1733 = vmatpush.msra.mxu0 0.0
      %1734 = vmatpush.msra.mxu0 0.0
      %1735 = vmatpush.msra.mxu0 0.0
      %1736 = vmatpush.msra.mxu0 0.0
      %1737 = vmatpush.msra.mxu0 0.0
      %1738 = vmatpush.msra.mxu0 0.0
      %1739 = vmatpush.msra.mxu0 %v1704
      %1740 = vmatpush.msra.mxu0 %v1703
      %1741 = vmatpush.msra.mxu0 %v1702
      %1742 = vmatpush.msra.mxu0 %v1701
      %1743 = vmatpush.msra.mxu0 %v1700
      %1744 = vmatpush.msra.mxu0 %v1699
      %1745 = vmatpush.msra.mxu0 %v1698
      %1746 = vmatpush.msra.mxu0 %v1697
      %1747 = vmatmul.f32.gmra.mxu0 %v1708
      %v1748 = vpop.f32.mrf.mxu0
      %v1749 = vadd.f32 %v1706, %v1748
      %1750 = vmatmul.f32.gmra.mxu0 %v1711
      %v1751 = vpop.f32.mrf.mxu0
      %v1752 = vadd.f32 %v1706, %v1751
      %1753 = vmatmul.f32.gmra.mxu0 %v1714
      %v1754 = vpop.f32.mrf.mxu0
      %v1755 = vadd.f32 %v1706, %v1754
      %1756 = vmatmul.f32.gmra.mxu0 %v1717
      %v1757 = vpop.f32.mrf.mxu0
      %v1758 = vadd.f32 %v1706, %v1757
      %1759 = vmatmul.f32.gmra.mxu0 %v1720
      %v1760 = vpop.f32.mrf.mxu0
      %v1761 = vadd.f32 %v1706, %v1760
      %1762 = vmatmul.f32.gmra.mxu0 %v1723
      %v1763 = vpop.f32.mrf.mxu0
      %v1764 = vadd.f32 %v1706, %v1763
      %1765 = vmatmul.f32.gmra.mxu0 %v1726
      %v1766 = vpop.f32.mrf.mxu0
      %v1767 = vadd.f32 %v1706, %v1766
      %1768 = vmatmul.f32.gmra.mxu0 %v1729
      %v1769 = vpop.f32.mrf.mxu0
      %v1770 = vadd.f32 %v1706, %v1769
      %1771 = vdwg.mxu0
      %v1772 = vmax.f32 %v1749, 0.0
      %v1773 = vmax.f32 %v1752, 0.0
      %v1774 = vmax.f32 %v1755, 0.0
      %v1775 = vmax.f32 %v1758, 0.0
      %v1776 = vmax.f32 %v1761, 0.0
      %v1777 = vmax.f32 %v1764, 0.0
      %v1778 = vmax.f32 %v1767, 0.0
      %v1779 = vmax.f32 %v1770, 0.0
      %1788 = vrot.lane.b32.xlu0 %v1772, 120
      %v1789 = vpop.permute.xlu0 %1788
      %1790 = vrot.lane.b32.xlu0 %v1773, 120
      %v1791 = vpop.permute.xlu0 %1790
      %1792 = vrot.lane.b32.xlu0 %v1774, 120
      %v1793 = vpop.permute.xlu0 %1792
      %1794 = vrot.lane.b32.xlu0 %v1775, 120
      %v1795 = vpop.permute.xlu0 %1794
      %1796 = vrot.lane.b32.xlu0 %v1776, 120
      %v1797 = vpop.permute.xlu0 %1796
      %1798 = vrot.lane.b32.xlu0 %v1777, 120
      %v1799 = vpop.permute.xlu0 %1798
      %1800 = vrot.lane.b32.xlu0 %v1778, 120
      %v1801 = vpop.permute.xlu0 %1800
      %1802 = vrot.lane.b32.xlu0 %v1779, 120
      %v1803 = vpop.permute.xlu0 %1802
      %vm1804 = vcmask 23552
      %v1805 = vsel %vm1804, %v1789, 0
      %v1807 = vsel %vm1804, %v1791, 0
      %v1809 = vsel %vm1804, %v1793, 0
      %v1811 = vsel %vm1804, %v1795, 0
      %v1813 = vsel %vm1804, %v1797, 0
      %v1815 = vsel %vm1804, %v1799, 0
      %v1817 = vsel %vm1804, %v1801, 0
      %v1819 = vsel %vm1804, %v1803, 0
      %v1821 = vsel %vm1804, %v1772, 0
      %v1823 = vsel %vm1804, %v1773, 0
      %v1825 = vsel %vm1804, %v1774, 0
      %v1827 = vsel %vm1804, %v1775, 0
      %v1829 = vsel %vm1804, %v1776, 0
      %v1831 = vsel %vm1804, %v1777, 0
      %v1833 = vsel %vm1804, %v1778, 0
      %v1835 = vsel %vm1804, %v1779, 0
      %1837 = vmatpush.xpose.msra.mxu0 0.0
      %1838 = vmatpush.xpose.msra.mxu0 0.0
      %1839 = vmatpush.xpose.msra.mxu0 0.0
      %1840 = vmatpush.xpose.msra.mxu0 0.0
      %1841 = vmatpush.xpose.msra.mxu0 0.0
      %1842 = vmatpush.xpose.msra.mxu0 0.0
      %1843 = vmatpush.xpose.msra.mxu0 0.0
      %1844 = vmatpush.xpose.msra.mxu0 0.0
      %1845 = vmatpush.xpose.msra.mxu0 %v1835
      %1846 = vmatpush.xpose.msra.mxu0 %v1833
      %1847 = vmatpush.xpose.msra.mxu0 %v1831
      %1848 = vmatpush.xpose.msra.mxu0 %v1829
      %1849 = vmatpush.xpose.msra.mxu0 %v1827
      %1850 = vmatpush.xpose.msra.mxu0 %v1825
      %1851 = vmatpush.xpose.msra.mxu0 %v1823
      %1852 = vmatpush.xpose.msra.mxu0 %v1821
      %1853 = vmatmul.f32.gmra.mxu0 %v1805
      %v1854 = vpop.f32.mrf.mxu0
      %v1855 = vadd.f32 0.0, %v1854
      %1856 = vmatmul.f32.gmra.mxu0 %v1807
      %v1857 = vpop.f32.mrf.mxu0
      %v1858 = vadd.f32 0.0, %v1857
      %1859 = vmatmul.f32.gmra.mxu0 %v1809
      %v1860 = vpop.f32.mrf.mxu0
      %v1861 = vadd.f32 0.0, %v1860
      %1862 = vmatmul.f32.gmra.mxu0 %v1811
      %v1863 = vpop.f32.mrf.mxu0
      %v1864 = vadd.f32 0.0, %v1863
      %1865 = vmatmul.f32.gmra.mxu0 %v1813
      %v1866 = vpop.f32.mrf.mxu0
      %v1867 = vadd.f32 0.0, %v1866
      %1868 = vmatmul.f32.gmra.mxu0 %v1815
      %v1869 = vpop.f32.mrf.mxu0
      %v1870 = vadd.f32 0.0, %v1869
      %1871 = vmatmul.f32.gmra.mxu0 %v1817
      %v1872 = vpop.f32.mrf.mxu0
      %v1873 = vadd.f32 0.0, %v1872
      %1874 = vmatmul.f32.gmra.mxu0 %v1819
      %v1875 = vpop.f32.mrf.mxu0
      %v1876 = vadd.f32 0.0, %v1875
      %1877 = vdwg.mxu0
      %v1878 = vsel %vm318, %v1855, -inf
      %1879 = vmax.xlane.f32.xlu0 %v1878
      %v1880 = vpop.xlane.xlu0 %1879
      %v1881 = vsel %vm318, %v1858, -inf
      %1882 = vmax.xlane.f32.xlu0 %v1881
      %v1883 = vpop.xlane.xlu0 %1882
      %v1884 = vsel %vm318, %v1861, -inf
      %1885 = vmax.xlane.f32.xlu0 %v1884
      %v1886 = vpop.xlane.xlu0 %1885
      %v1887 = vsel %vm318, %v1864, -inf
      %1888 = vmax.xlane.f32.xlu0 %v1887
      %v1889 = vpop.xlane.xlu0 %1888
      %v1890 = vsel %vm318, %v1867, -inf
      %1891 = vmax.xlane.f32.xlu0 %v1890
      %v1892 = vpop.xlane.xlu0 %1891
      %v1893 = vsel %vm318, %v1870, -inf
      %1894 = vmax.xlane.f32.xlu0 %v1893
      %v1895 = vpop.xlane.xlu0 %1894
      %v1896 = vsel %vm318, %v1873, -inf
      %1897 = vmax.xlane.f32.xlu0 %v1896
      %v1898 = vpop.xlane.xlu0 %1897
      %v1899 = vsel %vm318, %v1876, -inf
      %1900 = vmax.xlane.f32.xlu0 %v1899
      %v1901 = vpop.xlane.xlu0 %1900
      %v1902 = vsub.f32 %v1855, %v1880
      %v1903 = vsub.f32 %v1858, %v1883
      %v1904 = vsub.f32 %v1861, %v1886
      %v1905 = vsub.f32 %v1864, %v1889
      %v1906 = vsub.f32 %v1867, %v1892
      %v1907 = vsub.f32 %v1870, %v1895
      %v1908 = vsub.f32 %v1873, %v1898
      %v1909 = vsub.f32 %v1876, %v1901
      %v1910 = vmul.f32 %v1902, 1.442695
      %v1911 = vpow.pop %v1910
      %v1912 = vmul.f32 %v1903, 1.442695
      %v1913 = vpow.pop %v1912
      %v1914 = vmul.f32 %v1904, 1.442695
      %v1915 = vpow.pop %v1914
      %v1916 = vmul.f32 %v1905, 1.442695
      %v1917 = vpow.pop %v1916
      %v1918 = vmul.f32 %v1906, 1.442695
      %v1919 = vpow.pop %v1918
      %v1920 = vmul.f32 %v1907, 1.442695
      %v1921 = vpow.pop %v1920
      %v1922 = vmul.f32 %v1908, 1.442695
      %v1923 = vpow.pop %v1922
      %v1924 = vmul.f32 %v1909, 1.442695
      %v1925 = vpow.pop %v1924
      %v1926 = vsel %vm318, %v1911, 0.0
      %1927 = vadd.xlane.f32.xlu0 %v1926
      %v1928 = vpop.xlane.xlu0 %1927
      %v1929 = vsel %vm318, %v1913, 0.0
      %1930 = vadd.xlane.f32.xlu0 %v1929
      %v1931 = vpop.xlane.xlu0 %1930
      %v1932 = vsel %vm318, %v1915, 0.0
      %1933 = vadd.xlane.f32.xlu0 %v1932
      %v1934 = vpop.xlane.xlu0 %1933
      %v1935 = vsel %vm318, %v1917, 0.0
      %1936 = vadd.xlane.f32.xlu0 %v1935
      %v1937 = vpop.xlane.xlu0 %1936
      %v1938 = vsel %vm318, %v1919, 0.0
      %1939 = vadd.xlane.f32.xlu0 %v1938
      %v1940 = vpop.xlane.xlu0 %1939
      %v1941 = vsel %vm318, %v1921, 0.0
      %1942 = vadd.xlane.f32.xlu0 %v1941
      %v1943 = vpop.xlane.xlu0 %1942
      %v1944 = vsel %vm318, %v1923, 0.0
      %1945 = vadd.xlane.f32.xlu0 %v1944
      %v1946 = vpop.xlane.xlu0 %1945
      %v1947 = vsel %vm318, %v1925, 0.0
      %1948 = vadd.xlane.f32.xlu0 %v1947
      %v1949 = vpop.xlane.xlu0 %1948
      %v1950 = vrcp.pop %v1928
      %v1951 = vrcp.pop %v1931
      %v1952 = vrcp.pop %v1934
      %v1953 = vrcp.pop %v1937
      %v1954 = vrcp.pop %v1940
      %v1955 = vrcp.pop %v1943
      %v1956 = vrcp.pop %v1946
      %v1957 = vrcp.pop %v1949
      %v1958 = vmul.f32 %v1911, %v1950
      %v1959 = vmul.f32 %v1913, %v1951
      %v1960 = vmul.f32 %v1915, %v1952
      %v1961 = vmul.f32 %v1917, %v1953
      %v1962 = vmul.f32 %v1919, %v1954
      %v1963 = vmul.f32 %v1921, %v1955
      %v1964 = vmul.f32 %v1923, %v1956
      %v1965 = vmul.f32 %v1925, %v1957
      %v1967 = vsel %vm318, %v1958, 0
      %v1970 = vsel %vm318, %v1959, 0
      %v1973 = vsel %vm318, %v1960, 0
      %v1976 = vsel %vm318, %v1961, 0
      %v1979 = vsel %vm318, %v1962, 0
      %v1982 = vsel %vm318, %v1963, 0
      %v1985 = vsel %vm318, %v1964, 0
      %v1988 = vsel %vm318, %v1965, 0
      %1990 = vmatpush.msra.mxu0 0.0
      %1991 = vmatpush.msra.mxu0 0.0
      %1992 = vmatpush.msra.mxu0 0.0
      %1993 = vmatpush.msra.mxu0 0.0
      %1994 = vmatpush.msra.mxu0 0.0
      %1995 = vmatpush.msra.mxu0 0.0
      %1996 = vmatpush.msra.mxu0 0.0
      %1997 = vmatpush.msra.mxu0 0.0
      %1998 = vmatpush.msra.mxu0 %v1644
      %1999 = vmatpush.msra.mxu0 %v1643
      %2000 = vmatpush.msra.mxu0 %v1642
      %2001 = vmatpush.msra.mxu0 %v1641
      %2002 = vmatpush.msra.mxu0 %v1640
      %2003 = vmatpush.msra.mxu0 %v1639
      %2004 = vmatpush.msra.mxu0 %v1638
      %2005 = vmatpush.msra.mxu0 %v1637
      %2006 = vmatmul.f32.gmra.mxu0 %v1967
      %v2007 = vpop.f32.mrf.mxu0
      %v2008 = vadd.f32 0.0, %v2007
      %2009 = vmatmul.f32.gmra.mxu0 %v1970
      %v2010 = vpop.f32.mrf.mxu0
      %v2011 = vadd.f32 0.0, %v2010
      %2012 = vmatmul.f32.gmra.mxu0 %v1973
      %v2013 = vpop.f32.mrf.mxu0
      %v2014 = vadd.f32 0.0, %v2013
      %2015 = vmatmul.f32.gmra.mxu0 %v1976
      %v2016 = vpop.f32.mrf.mxu0
      %v2017 = vadd.f32 0.0, %v2016
      %2018 = vmatmul.f32.gmra.mxu0 %v1979
      %v2019 = vpop.f32.mrf.mxu0
      %v2020 = vadd.f32 0.0, %v2019
      %2021 = vmatmul.f32.gmra.mxu0 %v1982
      %v2022 = vpop.f32.mrf.mxu0
      %v2023 = vadd.f32 0.0, %v2022
      %2024 = vmatmul.f32.gmra.mxu0 %v1985
      %v2025 = vpop.f32.mrf.mxu0
      %v2026 = vadd.f32 0.0, %v2025
      %2027 = vmatmul.f32.gmra.mxu0 %v1988
      %v2028 = vpop.f32.mrf.mxu0
      %v2029 = vadd.f32 0.0, %v2028
      %2030 = vdwg.mxu0
      %v2031 = vld [vmem:[%s2 + $0x170] sm:$0xff]
      %v2032 = vld [vmem:[%s2 + $0x178] sm:$0xff]
      %v2033 = vld [vmem:[%s2 + $0x180] sm:$0xff]
      %v2034 = vld [vmem:[%s2 + $0x188] sm:$0xff]
      %v2035 = vld [vmem:[%s2 + $0x190] sm:$0x1]
      %v2036 = vperm.slane %v2035, 0
      %v2038 = vsel %vm492, %v2008, 0
      %v2041 = vsel %vm492, %v2011, 0
      %v2044 = vsel %vm492, %v2014, 0
      %v2047 = vsel %vm492, %v2017, 0
      %v2050 = vsel %vm492, %v2020, 0
      %v2053 = vsel %vm492, %v2023, 0
      %v2056 = vsel %vm492, %v2026, 0
      %v2059 = vsel %vm492, %v2029, 0
      %2061 = vmatpush.msra.mxu0 0.0
      %2062 = vmatpush.msra.mxu0 0.0
      %2063 = vmatpush.msra.mxu0 0.0
      %2064 = vmatpush.msra.mxu0 0.0
      %2065 = vmatpush.msra.mxu0 0.0
      %2066 = vmatpush.msra.mxu0 0.0
      %2067 = vmatpush.msra.mxu0 0.0
      %2068 = vmatpush.msra.mxu0 0.0
      %2069 = vmatpush.msra.mxu0 0.0
      %2070 = vmatpush.msra.mxu0 0.0
      %2071 = vmatpush.msra.mxu0 0.0
      %2072 = vmatpush.msra.mxu0 0.0
      %2073 = vmatpush.msra.mxu0 %v2034
      %2074 = vmatpush.msra.mxu0 %v2033
      %2075 = vmatpush.msra.mxu0 %v2032
      %2076 = vmatpush.msra.mxu0 %v2031
      %2077 = vmatmul.f32.gmra.mxu0 %v2038
      %v2078 = vpop.f32.mrf.mxu0
      %v2079 = vadd.f32 %v2036, %v2078
      %2080 = vmatmul.f32.gmra.mxu0 %v2041
      %v2081 = vpop.f32.mrf.mxu0
      %v2082 = vadd.f32 %v2036, %v2081
      %2083 = vmatmul.f32.gmra.mxu0 %v2044
      %v2084 = vpop.f32.mrf.mxu0
      %v2085 = vadd.f32 %v2036, %v2084
      %2086 = vmatmul.f32.gmra.mxu0 %v2047
      %v2087 = vpop.f32.mrf.mxu0
      %v2088 = vadd.f32 %v2036, %v2087
      %2089 = vmatmul.f32.gmra.mxu0 %v2050
      %v2090 = vpop.f32.mrf.mxu0
      %v2091 = vadd.f32 %v2036, %v2090
      %2092 = vmatmul.f32.gmra.mxu0 %v2053
      %v2093 = vpop.f32.mrf.mxu0
      %v2094 = vadd.f32 %v2036, %v2093
      %2095 = vmatmul.f32.gmra.mxu0 %v2056
      %v2096 = vpop.f32.mrf.mxu0
      %v2097 = vadd.f32 %v2036, %v2096
      %2098 = vmatmul.f32.gmra.mxu0 %v2059
      %v2099 = vpop.f32.mrf.mxu0
      %v2100 = vadd.f32 %v2036, %v2099
      %2101 = vdwg.mxu0
      %vm2102 = vcmask 130048
      %2103 = vst.msk [vmem:[%s217] sm:$0xff] %vm2102, %v2079
      %2104 = vst.msk [vmem:[%s217 + $0x8] sm:$0xff] %vm2102, %v2082
      %2105 = vst.msk [vmem:[%s217 + $0x10] sm:$0xff] %vm2102, %v2085
      %2106 = vst.msk [vmem:[%s217 + $0x18] sm:$0xff] %vm2102, %v2088
      %2107 = vst.msk [vmem:[%s217 + $0x20] sm:$0xff] %vm2102, %v2091
      %2108 = vst.msk [vmem:[%s217 + $0x28] sm:$0xff] %vm2102, %v2094
      %2109 = vst.msk [vmem:[%s217 + $0x30] sm:$0xff] %vm2102, %v2097
      %2110 = vst.msk [vmem:[%s217 + $0x38] sm:$0xff] %vm2102, %v2100
      %v2112 = vperm.slane %v229, 0
      %2113 = vrot.lane.b32.xlu0 %v2112, 16
      %v2114 = vpop.permute.xlu0 %2113
      %v2116 = vmul.f32 %v1616, %v2114
      %2118 = vrot.lane.b32.xlu0 %v2116, 112
      %v2119 = vpop.permute.xlu0 %2118
      %v2121 = vadd.f32 %v1594, %v2119
      %v2122 = vld [vmem:[%s2 + $0x198] sm:$0xff]
      %v2123 = vld [vmem:[%s2 + $0x1a0] sm:$0xff]
      %v2124 = vld [vmem:[%s2 + $0x1a8] sm:$0xff]
      %v2125 = vld [vmem:[%s2 + $0x1b0] sm:$0xff]
      %v2126 = vld [vmem:[%s2 + $0x1b8] sm:$0xff]
      %v2127 = vld [vmem:[%s2 + $0x1c0] sm:$0x1]
      %v2129 = vsel %vm2102, %v2121, 0
      %2131 = vmatpush.msra.mxu0 0.0
      %2132 = vmatpush.msra.mxu0 0.0
      %2133 = vmatpush.msra.mxu0 0.0
      %2134 = vmatpush.msra.mxu0 0.0
      %2135 = vmatpush.msra.mxu0 0.0
      %2136 = vmatpush.msra.mxu0 0.0
      %2137 = vmatpush.msra.mxu0 0.0
      %2138 = vmatpush.msra.mxu0 0.0
      %2139 = vmatpush.msra.mxu0 0.0
      %2140 = vmatpush.msra.mxu0 0.0
      %2141 = vmatpush.msra.mxu0 0.0
      %2142 = vmatpush.msra.mxu0 0.0
      %2143 = vmatpush.msra.mxu0 0.0
      %2144 = vmatpush.msra.mxu0 0.0
      %2145 = vmatpush.msra.mxu0 %v2125
      %2146 = vmatpush.msra.mxu0 %v2124
      %2147 = vmatmul.f32.gmra.mxu0 %v2129
      %v2148 = vpop.f32.mrf.mxu0
      %v2149 = vadd.f32 0.0, %v2148
      %2150 = vdwg.mxu0
      %v2151 = vperm.slane %v2149, 0
      %v2153 = vsel %vm2102, %v2079, 0
      %v2156 = vsel %vm2102, %v2082, 0
      %v2159 = vsel %vm2102, %v2085, 0
      %v2162 = vsel %vm2102, %v2088, 0
      %v2165 = vsel %vm2102, %v2091, 0
      %v2168 = vsel %vm2102, %v2094, 0
      %v2171 = vsel %vm2102, %v2097, 0
      %v2174 = vsel %vm2102, %v2100, 0
      %2176 = vmatpush.msra.mxu0 0.0
      %2177 = vmatpush.msra.mxu0 0.0
      %2178 = vmatpush.msra.mxu0 0.0
      %2179 = vmatpush.msra.mxu0 0.0
      %2180 = vmatpush.msra.mxu0 0.0
      %2181 = vmatpush.msra.mxu0 0.0
      %2182 = vmatpush.msra.mxu0 0.0
      %2183 = vmatpush.msra.mxu0 0.0
      %2184 = vmatpush.msra.mxu0 0.0
      %2185 = vmatpush.msra.mxu0 0.0
      %2186 = vmatpush.msra.mxu0 0.0
      %2187 = vmatpush.msra.mxu0 0.0
      %2188 = vmatpush.msra.mxu0 0.0
      %2189 = vmatpush.msra.mxu0 0.0
      %2190 = vmatpush.msra.mxu0 %v2123
      %2191 = vmatpush.msra.mxu0 %v2122
      %2192 = vmatmul.f32.gmra.mxu0 %v2153
      %v2193 = vpop.f32.mrf.mxu0
      %v2194 = vadd.f32 %v2151, %v2193
      %2195 = vmatmul.f32.gmra.mxu0 %v2156
      %v2196 = vpop.f32.mrf.mxu0
      %v2197 = vadd.f32 %v2151, %v2196
      %2198 = vmatmul.f32.gmra.mxu0 %v2159
      %v2199 = vpop.f32.mrf.mxu0
      %v2200 = vadd.f32 %v2151, %v2199
      %2201 = vmatmul.f32.gmra.mxu0 %v2162
      %v2202 = vpop.f32.mrf.mxu0
      %v2203 = vadd.f32 %v2151, %v2202
      %2204 = vmatmul.f32.gmra.mxu0 %v2165
      %v2205 = vpop.f32.mrf.mxu0
      %v2206 = vadd.f32 %v2151, %v2205
      %2207 = vmatmul.f32.gmra.mxu0 %v2168
      %v2208 = vpop.f32.mrf.mxu0
      %v2209 = vadd.f32 %v2151, %v2208
      %2210 = vmatmul.f32.gmra.mxu0 %v2171
      %v2211 = vpop.f32.mrf.mxu0
      %v2212 = vadd.f32 %v2151, %v2211
      %2213 = vmatmul.f32.gmra.mxu0 %v2174
      %v2214 = vpop.f32.mrf.mxu0
      %v2215 = vadd.f32 %v2151, %v2214
      %2216 = vdwg.mxu0
      %2217 = vmatpush.msra.mxu0 0.0
      %2218 = vmatpush.msra.mxu0 0.0
      %2219 = vmatpush.msra.mxu0 0.0
      %2220 = vmatpush.msra.mxu0 0.0
      %2221 = vmatpush.msra.mxu0 0.0
      %2222 = vmatpush.msra.mxu0 0.0
      %2223 = vmatpush.msra.mxu0 0.0
      %2224 = vmatpush.msra.mxu0 0.0
      %2225 = vmatpush.msra.mxu0 0.0
      %2226 = vmatpush.msra.mxu0 0.0
      %2227 = vmatpush.msra.mxu0 0.0
      %2228 = vmatpush.msra.mxu0 0.0
      %2229 = vmatpush.msra.mxu0 0.0
      %2230 = vmatpush.msra.mxu0 0.0
      %2231 = vmatpush.msra.mxu0 0.0
      %2232 = vmatpush.msra.mxu0 %v2126
      %2233 = vmatmul.f32.gmra.mxu0 %v236
      %v2234 = vpop.f32.mrf.mxu0
      %v2235 = vadd.f32 0.0, %v2234
      %2236 = vmatmul.f32.gmra.mxu0 %v239
      %v2237 = vpop.f32.mrf.mxu0
      %v2238 = vadd.f32 0.0, %v2237
      %2239 = vmatmul.f32.gmra.mxu0 %v242
      %v2240 = vpop.f32.mrf.mxu0
      %v2241 = vadd.f32 0.0, %v2240
      %2242 = vmatmul.f32.gmra.mxu0 %v245
      %v2243 = vpop.f32.mrf.mxu0
      %v2244 = vadd.f32 0.0, %v2243
      %2245 = vmatmul.f32.gmra.mxu0 %v248
      %v2246 = vpop.f32.mrf.mxu0
      %v2247 = vadd.f32 0.0, %v2246
      %2248 = vmatmul.f32.gmra.mxu0 %v251
      %v2249 = vpop.f32.mrf.mxu0
      %v2250 = vadd.f32 0.0, %v2249
      %2251 = vmatmul.f32.gmra.mxu0 %v254
      %v2252 = vpop.f32.mrf.mxu0
      %v2253 = vadd.f32 0.0, %v2252
      %2254 = vmatmul.f32.gmra.mxu0 %v257
      %v2255 = vpop.f32.mrf.mxu0
      %v2256 = vadd.f32 0.0, %v2255
      %2257 = vdwg.mxu0
      %v2258 = vadd.f32 %v2194, %v2235
      %v2259 = vadd.f32 %v2197, %v2238
      %v2260 = vadd.f32 %v2200, %v2241
      %v2261 = vadd.f32 %v2203, %v2244
      %v2262 = vadd.f32 %v2206, %v2247
      %v2263 = vadd.f32 %v2209, %v2250
      %v2264 = vadd.f32 %v2212, %v2253
      %v2265 = vadd.f32 %v2215, %v2256
      %v2266 = vperm.slane %v2127, 0
      %v2267 = vadd.f32 %v2258, %v2266
      %v2268 = vadd.f32 %v2259, %v2266
      %v2269 = vadd.f32 %v2260, %v2266
      %v2270 = vadd.f32 %v2261, %v2266
      %v2271 = vadd.f32 %v2262, %v2266
      %v2272 = vadd.f32 %v2263, %v2266
      %v2273 = vadd.f32 %v2264, %v2266
      %v2274 = vadd.f32 %v2265, %v2266
      %v2275 = vmax.f32 %v2267, 0.0
      %v2276 = vmax.f32 %v2268, 0.0
      %v2277 = vmax.f32 %v2269, 0.0
      %v2278 = vmax.f32 %v2270, 0.0
      %v2279 = vmax.f32 %v2271, 0.0
      %v2280 = vmax.f32 %v2272, 0.0
      %v2281 = vmax.f32 %v2273, 0.0
      %v2282 = vmax.f32 %v2274, 0.0
      %v2283 = vld [vmem:[%s2 + $0x1c8] sm:$0xff]
      %v2284 = vld [vmem:[%s2 + $0x1d0] sm:$0xff]
      %v2285 = vld [vmem:[%s2 + $0x1d8] sm:$0xff]
      %v2286 = vld [vmem:[%s2 + $0x1e0] sm:$0xff]
      %v2287 = vld [vmem:[%s2 + $0x1e8] sm:$0x1]
      %v2288 = vperm.slane %v2287, 0
      %v2290 = vsel %vm492, %v2275, 0
      %v2293 = vsel %vm492, %v2276, 0
      %v2296 = vsel %vm492, %v2277, 0
      %v2299 = vsel %vm492, %v2278, 0
      %v2302 = vsel %vm492, %v2279, 0
      %v2305 = vsel %vm492, %v2280, 0
      %v2308 = vsel %vm492, %v2281, 0
      %v2311 = vsel %vm492, %v2282, 0
      %2313 = vmatpush.msra.mxu0 0.0
      %2314 = vmatpush.msra.mxu0 0.0
      %2315 = vmatpush.msra.mxu0 0.0
      %2316 = vmatpush.msra.mxu0 0.0
      %2317 = vmatpush.msra.mxu0 0.0
      %2318 = vmatpush.msra.mxu0 0.0
      %2319 = vmatpush.msra.mxu0 0.0
      %2320 = vmatpush.msra.mxu0 0.0
      %2321 = vmatpush.msra.mxu0 0.0
      %2322 = vmatpush.msra.mxu0 0.0
      %2323 = vmatpush.msra.mxu0 0.0
      %2324 = vmatpush.msra.mxu0 0.0
      %2325 = vmatpush.msra.mxu0 %v2286
      %2326 = vmatpush.msra.mxu0 %v2285
      %2327 = vmatpush.msra.mxu0 %v2284
      %2328 = vmatpush.msra.mxu0 %v2283
      %2329 = vmatmul.f32.gmra.mxu0 %v2290
      %v2330 = vpop.f32.mrf.mxu0
      %v2331 = vadd.f32 %v2288, %v2330
      %2332 = vmatmul.f32.gmra.mxu0 %v2293
      %v2333 = vpop.f32.mrf.mxu0
      %v2334 = vadd.f32 %v2288, %v2333
      %2335 = vmatmul.f32.gmra.mxu0 %v2296
      %v2336 = vpop.f32.mrf.mxu0
      %v2337 = vadd.f32 %v2288, %v2336
      %2338 = vmatmul.f32.gmra.mxu0 %v2299
      %v2339 = vpop.f32.mrf.mxu0
      %v2340 = vadd.f32 %v2288, %v2339
      %2341 = vmatmul.f32.gmra.mxu0 %v2302
      %v2342 = vpop.f32.mrf.mxu0
      %v2343 = vadd.f32 %v2288, %v2342
      %2344 = vmatmul.f32.gmra.mxu0 %v2305
      %v2345 = vpop.f32.mrf.mxu0
      %v2346 = vadd.f32 %v2288, %v2345
      %2347 = vmatmul.f32.gmra.mxu0 %v2308
      %v2348 = vpop.f32.mrf.mxu0
      %v2349 = vadd.f32 %v2288, %v2348
      %2350 = vmatmul.f32.gmra.mxu0 %v2311
      %v2351 = vpop.f32.mrf.mxu0
      %v2352 = vadd.f32 %v2288, %v2351
      %2353 = vdwg.mxu0
      %v2354 = vmax.f32 %v2331, 0.0
      %v2355 = vmax.f32 %v2334, 0.0
      %v2356 = vmax.f32 %v2337, 0.0
      %v2357 = vmax.f32 %v2340, 0.0
      %v2358 = vmax.f32 %v2343, 0.0
      %v2359 = vmax.f32 %v2346, 0.0
      %v2360 = vmax.f32 %v2349, 0.0
      %v2361 = vmax.f32 %v2352, 0.0
      %v2362 = vld [vmem:[%s2 + $0x1f0] sm:$0xff]
      %v2363 = vld [vmem:[%s2 + $0x1f8] sm:$0xff]
      %v2364 = vld [vmem:[%s2 + $0x200] sm:$0xff]
      %v2365 = vld [vmem:[%s2 + $0x208] sm:$0xff]
      %v2366 = vld [vmem:[%s2 + $0x210] sm:$0x1]
      %v2367 = vperm.slane %v2366, 0
      %v2369 = vsel %vm492, %v2354, 0
      %v2372 = vsel %vm492, %v2355, 0
      %v2375 = vsel %vm492, %v2356, 0
      %v2378 = vsel %vm492, %v2357, 0
      %v2381 = vsel %vm492, %v2358, 0
      %v2384 = vsel %vm492, %v2359, 0
      %v2387 = vsel %vm492, %v2360, 0
      %v2390 = vsel %vm492, %v2361, 0
      %2392 = vmatpush.msra.mxu0 0.0
      %2393 = vmatpush.msra.mxu0 0.0
      %2394 = vmatpush.msra.mxu0 0.0
      %2395 = vmatpush.msra.mxu0 0.0
      %2396 = vmatpush.msra.mxu0 0.0
      %2397 = vmatpush.msra.mxu0 0.0
      %2398 = vmatpush.msra.mxu0 0.0
      %2399 = vmatpush.msra.mxu0 0.0
      %2400 = vmatpush.msra.mxu0 0.0
      %2401 = vmatpush.msra.mxu0 0.0
      %2402 = vmatpush.msra.mxu0 0.0
      %2403 = vmatpush.msra.mxu0 0.0
      %2404 = vmatpush.msra.mxu0 %v2365
      %2405 = vmatpush.msra.mxu0 %v2364
      %2406 = vmatpush.msra.mxu0 %v2363
      %2407 = vmatpush.msra.mxu0 %v2362
      %2408 = vmatmul.f32.gmra.mxu0 %v2369
      %v2409 = vpop.f32.mrf.mxu0
      %v2410 = vadd.f32 %v2367, %v2409
      %2411 = vmatmul.f32.gmra.mxu0 %v2372
      %v2412 = vpop.f32.mrf.mxu0
      %v2413 = vadd.f32 %v2367, %v2412
      %2414 = vmatmul.f32.gmra.mxu0 %v2375
      %v2415 = vpop.f32.mrf.mxu0
      %v2416 = vadd.f32 %v2367, %v2415
      %2417 = vmatmul.f32.gmra.mxu0 %v2378
      %v2418 = vpop.f32.mrf.mxu0
      %v2419 = vadd.f32 %v2367, %v2418
      %2420 = vmatmul.f32.gmra.mxu0 %v2381
      %v2421 = vpop.f32.mrf.mxu0
      %v2422 = vadd.f32 %v2367, %v2421
      %2423 = vmatmul.f32.gmra.mxu0 %v2384
      %v2424 = vpop.f32.mrf.mxu0
      %v2425 = vadd.f32 %v2367, %v2424
      %2426 = vmatmul.f32.gmra.mxu0 %v2387
      %v2427 = vpop.f32.mrf.mxu0
      %v2428 = vadd.f32 %v2367, %v2427
      %2429 = vmatmul.f32.gmra.mxu0 %v2390
      %v2430 = vpop.f32.mrf.mxu0
      %v2431 = vadd.f32 %v2367, %v2430
      %2432 = vdwg.mxu0
      %v2433 = vmax.f32 %v2410, 0.0
      %v2434 = vmax.f32 %v2413, 0.0
      %v2435 = vmax.f32 %v2416, 0.0
      %v2436 = vmax.f32 %v2419, 0.0
      %v2437 = vmax.f32 %v2422, 0.0
      %v2438 = vmax.f32 %v2425, 0.0
      %v2439 = vmax.f32 %v2428, 0.0
      %v2440 = vmax.f32 %v2431, 0.0
      %v2441 = vld [vmem:[%s2 + $0x218] sm:$0xff]
      %v2442 = vld [vmem:[%s2 + $0x220] sm:$0xff]
      %v2443 = vld [vmem:[%s2 + $0x228] sm:$0xff]
      %v2444 = vld [vmem:[%s2 + $0x230] sm:$0xff]
      %v2445 = vld [vmem:[%s2 + $0x238] sm:$0x1]
      %v2446 = vperm.slane %v2445, 0
      %v2448 = vsel %vm492, %v2433, 0
      %v2451 = vsel %vm492, %v2434, 0
      %v2454 = vsel %vm492, %v2435, 0
      %v2457 = vsel %vm492, %v2436, 0
      %v2460 = vsel %vm492, %v2437, 0
      %v2463 = vsel %vm492, %v2438, 0
      %v2466 = vsel %vm492, %v2439, 0
      %v2469 = vsel %vm492, %v2440, 0
      %2471 = vmatpush.msra.mxu0 0.0
      %2472 = vmatpush.msra.mxu0 0.0
      %2473 = vmatpush.msra.mxu0 0.0
      %2474 = vmatpush.msra.mxu0 0.0
      %2475 = vmatpush.msra.mxu0 0.0
      %2476 = vmatpush.msra.mxu0 0.0
      %2477 = vmatpush.msra.mxu0 0.0
      %2478 = vmatpush.msra.mxu0 0.0
      %2479 = vmatpush.msra.mxu0 0.0
      %2480 = vmatpush.msra.mxu0 0.0
      %2481 = vmatpush.msra.mxu0 0.0
      %2482 = vmatpush.msra.mxu0 0.0
      %2483 = vmatpush.msra.mxu0 %v2444
      %2484 = vmatpush.msra.mxu0 %v2443
      %2485 = vmatpush.msra.mxu0 %v2442
      %2486 = vmatpush.msra.mxu0 %v2441
      %2487 = vmatmul.f32.gmra.mxu0 %v2448
      %v2488 = vpop.f32.mrf.mxu0
      %v2489 = vadd.f32 %v2446, %v2488
      %2490 = vmatmul.f32.gmra.mxu0 %v2451
      %v2491 = vpop.f32.mrf.mxu0
      %v2492 = vadd.f32 %v2446, %v2491
      %2493 = vmatmul.f32.gmra.mxu0 %v2454
      %v2494 = vpop.f32.mrf.mxu0
      %v2495 = vadd.f32 %v2446, %v2494
      %2496 = vmatmul.f32.gmra.mxu0 %v2457
      %v2497 = vpop.f32.mrf.mxu0
      %v2498 = vadd.f32 %v2446, %v2497
      %2499 = vmatmul.f32.gmra.mxu0 %v2460
      %v2500 = vpop.f32.mrf.mxu0
      %v2501 = vadd.f32 %v2446, %v2500
      %2502 = vmatmul.f32.gmra.mxu0 %v2463
      %v2503 = vpop.f32.mrf.mxu0
      %v2504 = vadd.f32 %v2446, %v2503
      %2505 = vmatmul.f32.gmra.mxu0 %v2466
      %v2506 = vpop.f32.mrf.mxu0
      %v2507 = vadd.f32 %v2446, %v2506
      %2508 = vmatmul.f32.gmra.mxu0 %v2469
      %v2509 = vpop.f32.mrf.mxu0
      %v2510 = vadd.f32 %v2446, %v2509
      %2511 = vdwg.mxu0
      %v2512 = vmax.f32 %v2489, 0.0
      %v2513 = vmax.f32 %v2492, 0.0
      %v2514 = vmax.f32 %v2495, 0.0
      %v2515 = vmax.f32 %v2498, 0.0
      %v2516 = vmax.f32 %v2501, 0.0
      %v2517 = vmax.f32 %v2504, 0.0
      %v2518 = vmax.f32 %v2507, 0.0
      %v2519 = vmax.f32 %v2510, 0.0
      %v2520 = vld [vmem:[%s2 + $0x240] sm:$0xff]
      %v2521 = vld [vmem:[%s2 + $0x248] sm:$0xff]
      %v2522 = vld [vmem:[%s2 + $0x250] sm:$0xff]
      %v2523 = vld [vmem:[%s2 + $0x258] sm:$0xff]
      %v2524 = vld [vmem:[%s2 + $0x260] sm:$0x1]
      %v2525 = vperm.slane %v2524, 0
      %v2527 = vsel %vm492, %v2512, 0
      %v2530 = vsel %vm492, %v2513, 0
      %v2533 = vsel %vm492, %v2514, 0
      %v2536 = vsel %vm492, %v2515, 0
      %v2539 = vsel %vm492, %v2516, 0
      %v2542 = vsel %vm492, %v2517, 0
      %v2545 = vsel %vm492, %v2518, 0
      %v2548 = vsel %vm492, %v2519, 0
      %2550 = vmatpush.msra.mxu0 0.0
      %2551 = vmatpush.msra.mxu0 0.0
      %2552 = vmatpush.msra.mxu0 0.0
      %2553 = vmatpush.msra.mxu0 0.0
      %2554 = vmatpush.msra.mxu0 0.0
      %2555 = vmatpush.msra.mxu0 0.0
      %2556 = vmatpush.msra.mxu0 0.0
      %2557 = vmatpush.msra.mxu0 0.0
      %2558 = vmatpush.msra.mxu0 0.0
      %2559 = vmatpush.msra.mxu0 0.0
      %2560 = vmatpush.msra.mxu0 0.0
      %2561 = vmatpush.msra.mxu0 0.0
      %2562 = vmatpush.msra.mxu0 %v2523
      %2563 = vmatpush.msra.mxu0 %v2522
      %2564 = vmatpush.msra.mxu0 %v2521
      %2565 = vmatpush.msra.mxu0 %v2520
      %2566 = vmatmul.f32.gmra.mxu0 %v2527
      %v2567 = vpop.f32.mrf.mxu0
      %v2568 = vadd.f32 %v2525, %v2567
      %2569 = vmatmul.f32.gmra.mxu0 %v2530
      %v2570 = vpop.f32.mrf.mxu0
      %v2571 = vadd.f32 %v2525, %v2570
      %2572 = vmatmul.f32.gmra.mxu0 %v2533
      %v2573 = vpop.f32.mrf.mxu0
      %v2574 = vadd.f32 %v2525, %v2573
      %2575 = vmatmul.f32.gmra.mxu0 %v2536
      %v2576 = vpop.f32.mrf.mxu0
      %v2577 = vadd.f32 %v2525, %v2576
      %2578 = vmatmul.f32.gmra.mxu0 %v2539
      %v2579 = vpop.f32.mrf.mxu0
      %v2580 = vadd.f32 %v2525, %v2579
      %2581 = vmatmul.f32.gmra.mxu0 %v2542
      %v2582 = vpop.f32.mrf.mxu0
      %v2583 = vadd.f32 %v2525, %v2582
      %2584 = vmatmul.f32.gmra.mxu0 %v2545
      %v2585 = vpop.f32.mrf.mxu0
      %v2586 = vadd.f32 %v2525, %v2585
      %2587 = vmatmul.f32.gmra.mxu0 %v2548
      %v2588 = vpop.f32.mrf.mxu0
      %v2589 = vadd.f32 %v2525, %v2588
      %2590 = vdwg.mxu0
      %v2591 = vmax.f32 %v2568, 0.0
      %v2592 = vmax.f32 %v2571, 0.0
      %v2593 = vmax.f32 %v2574, 0.0
      %v2594 = vmax.f32 %v2577, 0.0
      %v2595 = vmax.f32 %v2580, 0.0
      %v2596 = vmax.f32 %v2583, 0.0
      %v2597 = vmax.f32 %v2586, 0.0
      %v2598 = vmax.f32 %v2589, 0.0
      %v2599 = vand.u32 2147483647, %v2568
      %v2600 = vand.u32 2147483647, %v2571
      %v2601 = vand.u32 2147483647, %v2574
      %v2602 = vand.u32 2147483647, %v2577
      %v2603 = vand.u32 2147483647, %v2580
      %v2604 = vand.u32 2147483647, %v2583
      %v2605 = vand.u32 2147483647, %v2586
      %v2606 = vand.u32 2147483647, %v2589
      %v2607 = vsub.f32 0.0, %v2599
      %v2608 = vsub.f32 0.0, %v2600
      %v2609 = vsub.f32 0.0, %v2601
      %v2610 = vsub.f32 0.0, %v2602
      %v2611 = vsub.f32 0.0, %v2603
      %v2612 = vsub.f32 0.0, %v2604
      %v2613 = vsub.f32 0.0, %v2605
      %v2614 = vsub.f32 0.0, %v2606
      %v2615 = vmul.f32 %v2607, 1.442695
      %v2616 = vpow.pop %v2615
      %v2617 = vmul.f32 %v2608, 1.442695
      %v2618 = vpow.pop %v2617
      %v2619 = vmul.f32 %v2609, 1.442695
      %v2620 = vpow.pop %v2619
      %v2621 = vmul.f32 %v2610, 1.442695
      %v2622 = vpow.pop %v2621
      %v2623 = vmul.f32 %v2611, 1.442695
      %v2624 = vpow.pop %v2623
      %v2625 = vmul.f32 %v2612, 1.442695
      %v2626 = vpow.pop %v2625
      %v2627 = vmul.f32 %v2613, 1.442695
      %v2628 = vpow.pop %v2627
      %v2629 = vmul.f32 %v2614, 1.442695
      %v2630 = vpow.pop %v2629
      %v2631 = vadd.f32 %v2616, 1.0
      %v2632 = vadd.f32 %v2618, 1.0
      %v2633 = vadd.f32 %v2620, 1.0
      %v2634 = vadd.f32 %v2622, 1.0
      %v2635 = vadd.f32 %v2624, 1.0
      %v2636 = vadd.f32 %v2626, 1.0
      %v2637 = vadd.f32 %v2628, 1.0
      %v2638 = vadd.f32 %v2630, 1.0
      %v2639 = vlog2.pop %v2631
      %v2640 = vmul.f32 %v2639, 0.6931472
      %v2641 = vlog2.pop %v2632
      %v2642 = vmul.f32 %v2641, 0.6931472
      %v2643 = vlog2.pop %v2633
      %v2644 = vmul.f32 %v2643, 0.6931472
      %v2645 = vlog2.pop %v2634
      %v2646 = vmul.f32 %v2645, 0.6931472
      %v2647 = vlog2.pop %v2635
      %v2648 = vmul.f32 %v2647, 0.6931472
      %v2649 = vlog2.pop %v2636
      %v2650 = vmul.f32 %v2649, 0.6931472
      %v2651 = vlog2.pop %v2637
      %v2652 = vmul.f32 %v2651, 0.6931472
      %v2653 = vlog2.pop %v2638
      %v2654 = vmul.f32 %v2653, 0.6931472
      %v2655 = vadd.f32 %v2591, %v2640
      %v2656 = vadd.f32 %v2592, %v2642
      %v2657 = vadd.f32 %v2593, %v2644
      %v2658 = vadd.f32 %v2594, %v2646
      %v2659 = vadd.f32 %v2595, %v2648
      %v2660 = vadd.f32 %v2596, %v2650
      %v2661 = vadd.f32 %v2597, %v2652
      %v2662 = vadd.f32 %v2598, %v2654
      %v2663 = vmul.f32 %v2655, 0.9
      %v2664 = vmul.f32 %v2656, 0.9
      %v2665 = vmul.f32 %v2657, 0.9
      %v2666 = vmul.f32 %v2658, 0.9
      %v2667 = vmul.f32 %v2659, 0.9
      %v2668 = vmul.f32 %v2660, 0.9
      %v2669 = vmul.f32 %v2661, 0.9
      %v2670 = vmul.f32 %v2662, 0.9
      %v2671 = vadd.f32 %v2663, 0.1
      %v2672 = vadd.f32 %v2664, 0.1
      %v2673 = vadd.f32 %v2665, 0.1
      %v2674 = vadd.f32 %v2666, 0.1
      %v2675 = vadd.f32 %v2667, 0.1
      %v2676 = vadd.f32 %v2668, 0.1
      %v2677 = vadd.f32 %v2669, 0.1
      %v2678 = vadd.f32 %v2670, 0.1
      %vm2679 = vcmp.eq.s32.totalorder %v485, 0
      %v2680 = vsel %vm2679, %v2568, %v2671
      %v2681 = vsel %vm2679, %v2571, %v2672
      %v2682 = vsel %vm2679, %v2574, %v2673
      %v2683 = vsel %vm2679, %v2577, %v2674
      %v2684 = vsel %vm2679, %v2580, %v2675
      %v2685 = vsel %vm2679, %v2583, %v2676
      %v2686 = vsel %vm2679, %v2586, %v2677
      %v2687 = vsel %vm2679, %v2589, %v2678
      %2696 = vrot.lane.b32.xlu0 %v2680, 16
      %v2697 = vpop.permute.xlu0 %2696
      %2698 = vrot.lane.b32.xlu0 %v2681, 16
      %v2699 = vpop.permute.xlu0 %2698
      %2700 = vrot.lane.b32.xlu0 %v2682, 16
      %v2701 = vpop.permute.xlu0 %2700
      %2702 = vrot.lane.b32.xlu0 %v2683, 16
      %v2703 = vpop.permute.xlu0 %2702
      %2704 = vrot.lane.b32.xlu0 %v2684, 16
      %v2705 = vpop.permute.xlu0 %2704
      %2706 = vrot.lane.b32.xlu0 %v2685, 16
      %v2707 = vpop.permute.xlu0 %2706
      %2708 = vrot.lane.b32.xlu0 %v2686, 16
      %v2709 = vpop.permute.xlu0 %2708
      %2710 = vrot.lane.b32.xlu0 %v2687, 16
      %v2711 = vpop.permute.xlu0 %2710
      %vm2720 = vcmask 146560
      %2721 = vst.msk [vmem:[%s217] sm:$0xff] %vm2720, %v2697
      %2722 = vst.msk [vmem:[%s217 + $0x8] sm:$0xff] %vm2720, %v2699
      %2723 = vst.msk [vmem:[%s217 + $0x10] sm:$0xff] %vm2720, %v2701
      %2724 = vst.msk [vmem:[%s217 + $0x18] sm:$0xff] %vm2720, %v2703
      %2725 = vst.msk [vmem:[%s217 + $0x20] sm:$0xff] %vm2720, %v2705
      %2726 = vst.msk [vmem:[%s217 + $0x28] sm:$0xff] %vm2720, %v2707
      %2727 = vst.msk [vmem:[%s217 + $0x30] sm:$0xff] %vm2720, %v2709
      %2728 = vst.msk [vmem:[%s217 + $0x38] sm:$0xff] %vm2720, %v2711
      %p2729 = scmp.lt.s32.totalorder %s16, 1
      %s2730 = scalar_select %p2729, %s16, 1
      %s2731 = smul.addr %s2730, 8
      %s2732 = smul.addr %s2731, 8
      %s2733 = scalar_lea.vmem %s3, %s2732
      %p2734 = scmp.lt.s32.totalorder %s16, 1
      %s2735 = scalar_select %p2734, %s16, 1
      %s2736 = scalar_lea.vmem %s4, %s2735
      // Predicated region
      $region33: #{forward.1} parent=31 // pred_check
        %p2737 = pneg %p107
      $region34: #{forward.1} parent=31 // pred_check_branch
        %2739 = sbr.rel (%p2737) target = $region36
      $region35: #{forward.1} parent=31 // pred_region
        _
      $region36: #{forward.1} parent=31 // pred_fallthru
        _
      // Predicated region
      $region37: #{forward.1} parent=31 // pred_check
        %p2740 = pneg %p133
      $region38: #{forward.1} parent=31 // pred_check_branch
        %2742 = sbr.rel (%p2740) target = $region40
      $region39: #{forward.1} parent=31 // pred_region
        _
      $region40: #{forward.1} parent=31 // pred_fallthru
        _
    $region32: #{forward.1} parent=5 // pred_fallthru
      _
    %p2743 = scmp.le.s32.totalorder 2, %s11
    // Predicated region
    $region41: #{forward.1} parent=5 // pred_check
      %p2744 = pneg %p2743
    $region42: #{forward.1} parent=5 // pred_check_branch
      %2746 = sbr.rel (%p2744) target = $region44
    $region43: #{forward.1} parent=5 // pred_region
      %s2747 = ssub.s32 %s11, 2
      // Predicated region
      $region45: #{forward.1} parent=43 // pred_check
        %p2748 = pneg %p113
      $region46: #{forward.1} parent=43 // pred_check_branch
        %2750 = sbr.rel (%p2748) target = $region48
      $region47: #{forward.1} parent=43 // pred_region
        %p2751 = scmp.lt.s32.totalorder %s17, 1
        %s2752 = scalar_select %p2751, %s17, 1
        %s2753 = smul.addr %s2752, 8
        %s2754 = smul.addr %s2753, 8
        %s2755 = scalar_lea.vmem %s3, %s2754
      $region48: #{forward.1} parent=43 // pred_fallthru
        _
      // Predicated region
      $region49: #{forward.1} parent=43 // pred_check
        %p2756 = pneg %p139
      $region50: #{forward.1} parent=43 // pred_check_branch
        %2758 = sbr.rel (%p2756) target = $region52
      $region51: #{forward.1} parent=43 // pred_region
        %p2759 = scmp.lt.s32.totalorder %s17, 1
        %s2760 = scalar_select %p2759, %s17, 1
        %s2761 = scalar_lea.vmem %s4, %s2760
      $region52: #{forward.1} parent=43 // pred_fallthru
        _
    $region44: #{forward.1} parent=5 // pred_fallthru
      _
  $region6: #{forward.1} parent=0 // loop_footer
    %s15 = sadd.s32 1, %s11
  $region7: #{forward.1} parent=0 // loop_footer_branch
    %10 = sbr.rel target = $region3
  $region8: #{forward.1} parent=0 // loop_exit
    _

</llo_original>
